<compile_context>
chip_gen: v5e
topology: v5e:2x2
jax: 0.10.0
libtpu: 0.0.40
codegen_flags: <defaults>
</compile_context>

<pallas_src>
import jax
import jax.numpy as jnp
from jax import lax
from jax.experimental import pallas as pl
from jax.experimental.pallas import tpu as pltpu


def _ce_rowloss_kernel(x_ref, wt_ref, y_ref, loss_ref):
    """One batch tile: logits = x @ Wt on the MXU, then a stable per-row CE loss.

    x_ref   : (TB, H) f32   activation tile for this grid step
    wt_ref  : (H, H)  f32   weight pre-transposed to [K, N]; resident across the grid
    y_ref   : (TB, 1) int32 target class per row
    loss_ref: (TB, 1) f32   per-row loss (the mean is taken in the wrapper)
    """
    x = x_ref[...]
    wt = wt_ref[...]

    # RHS already in [K, N] -> native MXU weight push; f32 accumulation.
    # TODO(synk): cast x/wt to bfloat16 here for ~3x MXU throughput on v6e/v7x if the caller
    # can tolerate ~1e-3 relative error in the loss (kept f32 to meet the 1e-5 check below).
    logits = jnp.dot(x, wt, preferred_element_type=jnp.float32)        # (TB, H)

    # Numerically stable cross-entropy per row:
    #   loss = log(sum exp(logits - m)) - (logits - m)[y]
    m = jnp.max(logits, axis=-1, keepdims=True)                        # (TB, 1)
    shifted = logits - m                                               # (TB, H)
    sumexp = jnp.sum(jnp.exp(shifted), axis=-1, keepdims=True)         # (TB, 1)

    col = lax.broadcasted_iota(jnp.int32, logits.shape, 1)             # (TB, H)
    y = y_ref[...]                                                     # (TB, 1)
    picked = jnp.sum(jnp.where(col == y, shifted, 0.0),
                     axis=-1, keepdims=True)                           # (TB, 1) = shifted[b, y_b]

    loss_ref[...] = jnp.log(sumexp) - picked                           # per-row loss


def simple_model_loss(x, w, y, *, tb=None, vmem_limit_bytes=56 * 1024 * 1024):
    """CrossEntropyLoss(x @ w.T, y) with w in torch Linear layout (out_features, in_features)."""
    B, H = x.shape
    assert w.shape == (H, H), w.shape
    assert B % 8 == 0, B
    # NOTE: like the reference below (and unlike torch), out-of-range targets are not trapped;
    # inputs are assumed to satisfy 0 <= y < H.

    if tb is None:
        # Largest batch tile that divides B, is a multiple of 8, and fits the VMEM budget
        # alongside the resident (worst-case double-buffered) weight tile.
        w_bytes = 2 * H * H * 4
        per_row_bytes = 6 * H * 4              # x double-buffer + logits/exp working set
        cap = max(8, (vmem_limit_bytes - w_bytes) // per_row_bytes)
        tb = min(B, 512, cap)
        tb -= tb % 8
        while tb > 8 and B % tb:
            tb -= 8
    assert B % tb == 0 and tb % 8 == 0, (B, tb)

    # One-time HBM-side transpose to the MXU-native [K, N] layout.
    wt = w.T
    y2 = y.astype(jnp.int32).reshape(B, 1)

    per_row = pl.pallas_call(
        _ce_rowloss_kernel,
        out_shape=jax.ShapeDtypeStruct((B, 1), jnp.float32),
        grid_spec=pltpu.PrefetchScalarGridSpec(
            num_scalar_prefetch=0,
            grid=(B // tb,),
            in_specs=[
                pl.BlockSpec((tb, H), lambda i: (i, 0)),     # x: one batch tile per step
                pl.BlockSpec((H, H), lambda i: (0, 0)),      # Wt: resident across the grid
                pl.BlockSpec((tb, 1), lambda i: (i, 0)),     # y: one batch tile per step
            ],
            out_specs=pl.BlockSpec((tb, 1), lambda i: (i, 0)),
        ),
        compiler_params=pltpu.CompilerParams(
            dimension_semantics=("parallel",),               # tiles independent -> megacore-able
            vmem_limit_bytes=vmem_limit_bytes,
        ),
    )(x, wt, y2)

    # Tiny final reduction in XLA (B adds); no per-step scalar accumulate chain in the kernel.
    return jnp.mean(per_row)


def reference_loss(x, w, y):
    logits = x @ w.T
    lse = jax.scipy.special.logsumexp(logits, axis=-1)
    picked = jnp.take_along_axis(logits, y[:, None], axis=-1)[:, 0]
    return jnp.mean(lse - picked)


if __name__ == "__main__":
    # Lane/MXU-friendly demo shapes; auto-chosen tb=512 gives 2 grid steps, exercising the
    # grid-indexed per-row output path while keeping the run tiny.
    B, H = 1024, 256

    key = jax.random.PRNGKey(0)
    kx, kw, ky = jax.random.split(key, 3)

    x = jax.random.normal(kx, (B, H), dtype=jnp.float32)
    # Deterministic Linear weight init (Kaiming-uniform-like bound, as torch.nn.Linear).
    bound = 1.0 / (H ** 0.5)
    w = jax.random.uniform(kw, (H, H), dtype=jnp.float32, minval=-bound, maxval=bound)
    y = jax.random.randint(ky, (B,), 0, H, dtype=jnp.int32)

    loss = jax.block_until_ready(simple_model_loss(x, w, y))
    ref = jax.block_until_ready(reference_loss(x, w, y))
    assert jnp.allclose(loss, ref, rtol=1e-5, atol=1e-5), (loss, ref)

    print("KERNEL_OK")
</pallas_src>

<mosaic_0001>
module attributes {stable_mosaic.version = 11 : i64} {
  func.func @_ce_rowloss_kernel(%arg0: i32, %arg1: memref<512x256xf32, #tpu.memory_space<vmem>>, %arg2: memref<256x256xf32, #tpu.memory_space<vmem>>, %arg3: memref<512x1xi32, #tpu.memory_space<vmem>>, %arg4: memref<512x1xf32, #tpu.memory_space<vmem>>) attributes {dimension_semantics = [#tpu.dimension_semantics<parallel>], iteration_bounds = array<i64: 2>, scalar_prefetch = 0 : i64, scratch_operands = 0 : i64, tpu.core_type = #tpu.core_type<tc>, window_params = [{transform_indices = @transform_0, window_bounds = array<i64: 512, 256>}, {pipeline_mode = #tpu.pipeline_mode<synchronous>, transform_indices = @transform_1, window_bounds = array<i64: 256, 256>}, {transform_indices = @transform_2, window_bounds = array<i64: 512, 1>}, {transform_indices = @transform_3, window_bounds = array<i64: 512, 1>}]} {
    %c0 = arith.constant 0 : index
    %c0_0 = arith.constant 0 : index
    %0 = vector.load %arg1[%c0, %c0_0] : memref<512x256xf32, #tpu.memory_space<vmem>>, vector<512x256xf32>
    %c0_1 = arith.constant 0 : index
    %c0_2 = arith.constant 0 : index
    %1 = vector.load %arg2[%c0_1, %c0_2] : memref<256x256xf32, #tpu.memory_space<vmem>>, vector<256x256xf32>
    %cst = arith.constant dense<0.000000e+00> : vector<512x256xf32>
    %2 = tpu.matmul %0, %1, %cst {dimension_numbers = #tpu.dot_dimension_numbers<[1], [0], [0], [1], [0, 0, 1, 1], [], []>} : vector<512x256xf32>, vector<256x256xf32>, vector<512x256xf32> -> vector<512x256xf32>
    %cst_3 = arith.constant dense<0xFF800000> : vector<512xf32>
    %3 = vector.multi_reduction <maximumf>, %2, %cst_3 [1] : vector<512x256xf32> to vector<512xf32>
    %4 = vector.shape_cast %3 : vector<512xf32> to vector<512x1xf32>
    %5 = vector.broadcast %4 : vector<512x1xf32> to vector<512x256xf32>
    %6 = arith.subf %2, %5 : vector<512x256xf32>
    %7 = math.exp %6 : vector<512x256xf32>
    %cst_4 = arith.constant dense<0.000000e+00> : vector<512xf32>
    %8 = vector.multi_reduction <add>, %7, %cst_4 [1] : vector<512x256xf32> to vector<512xf32>
    %9 = vector.shape_cast %8 : vector<512xf32> to vector<512x1xf32>
    %10 = tpu.iota {dimensions = array<i32: 1>} : vector<512x256xi32>
    %c0_5 = arith.constant 0 : index
    %c0_6 = arith.constant 0 : index
    %11 = vector.load %arg3[%c0_5, %c0_6] : memref<512x1xi32, #tpu.memory_space<vmem>>, vector<512x1xi32>
    %12 = vector.broadcast %11 : vector<512x1xi32> to vector<512x256xi32>
    %13 = arith.cmpi eq, %10, %12 : vector<512x256xi32>
    %cst_7 = arith.constant 0.000000e+00 : f32
    %14 = vector.broadcast %cst_7 : f32 to vector<512x256xf32>
    %15 = arith.select %13, %6, %14 : vector<512x256xi1>, vector<512x256xf32>
    %cst_8 = arith.constant dense<0.000000e+00> : vector<512xf32>
    %16 = vector.multi_reduction <add>, %15, %cst_8 [1] : vector<512x256xf32> to vector<512xf32>
    %17 = vector.shape_cast %16 : vector<512xf32> to vector<512x1xf32>
    %18 = math.log %9 : vector<512x1xf32>
    %19 = arith.subf %18, %17 : vector<512x1xf32>
    %c0_9 = arith.constant 0 : index
    %c0_10 = arith.constant 0 : index
    %20 = vector.load %arg4[%c0_9, %c0_10] : memref<512x1xf32, #tpu.memory_space<vmem>>, vector<512x1xf32>
    tpu.vector_store %arg4[%c0_9, %c0_10], %19 {strides = array<i32>} : memref<512x1xf32, #tpu.memory_space<vmem>>, vector<512x1xf32>,
    return
  }
  func.func @transform_0(%arg0: i32) -> (i32, i32) {
    %c0_i32 = arith.constant 0 : i32
    %c0_i32_0 = arith.constant 0 : i32
    return %arg0, %c0_i32 : i32, i32
  }
  func.func @transform_1(%arg0: i32) -> (i32, i32) {
    %c0_i32 = arith.constant 0 : i32
    %c0_i32_0 = arith.constant 0 : i32
    %c0_i32_1 = arith.constant 0 : i32
    return %c0_i32, %c0_i32_0 : i32, i32
  }
  func.func @transform_2(%arg0: i32) -> (i32, i32) {
    %c0_i32 = arith.constant 0 : i32
    %c0_i32_0 = arith.constant 0 : i32
    return %arg0, %c0_i32 : i32, i32
  }
  func.func @transform_3(%arg0: i32) -> (i32, i32) {
    %c0_i32 = arith.constant 0 : i32
    %c0_i32_0 = arith.constant 0 : i32
    return %arg0, %c0_i32 : i32, i32
  }
}

</mosaic_0001>

<llo_original>
// kernel: tpu_custom_call.1
$region0: #{tpu_custom_call.1}
  #allocation0 [shape = 'u32[]', space=smem, size = 0x4, offset = 0x4, fixed_abs, tag = 'smem constant byte address 0x4 - core index']
  #allocation1 [shape = 'u32[72,128]{1,0:T(1,128)}', space=vmem, size = 0x9000, scoped, tag = 'internal scratch']
  %s0 = inlined_call_operand.hbm [shape: f32[1024,256], index: 0, kind: input, shape index: {}]
  %s1 = inlined_call_operand.vmem [shape: f32[256,256], index: 1, kind: input, shape index: {}]
  %s2 = inlined_call_operand.vmem [shape: s32[1024,1], index: 2, kind: input, shape index: {}]
  %s3 = inlined_call_operand.vmem [shape: f32[1024,1], index: 3, kind: output, shape index: {}]
  %s4 = sld [smem:[#allocation0]]
  $region49: #{tpu_custom_call.1} parent=0
    _
  %s6 = ssub.s32 1, %s4
  %s7 = scalar_select 0, %s6, %s4
  $region1: #{tpu_custom_call.1} parent=0
    #allocation2 [shape = 'u8[1048576]{0}', space=vmem, size = 0x100000, scoped, tag = 'input window, operand 0']
    #allocation3 [shape = 's32[2]{0}', space=sflag, size = 0x8, scoped, tag = 'scoped memory for tpu_custom_call.1']
    %8 = vsyncpa [#allocation3], 0
    %s9 = scalar_lea.sflag [#allocation3], 1
    %10 = vsyncpa %s9, 0
    loop: start=0, step=1, limit=4
    $region2: #{tpu_custom_call.1} parent=1 // loop_pre_header
      _
    $region3: #{tpu_custom_call.1} parent=1 // loop_header
      %s12 = sphi 0, %s16
      %p13 = scmp.ge.s32.totalorder %s12, 4
      %s22 = sphi 0, %s24
      %s25 = sphi 0, %s22
      %s26 = sphi 0, %s25
      %s42 = sphi 0, %s26
      %s46 = sphi 0, %s46
      %s48 = sphi 0, %s46
      %s49 = sphi 0, %s48
      %s63 = sphi 0, %s49
      %s69 = sphi 0, %s71
      %s72 = sphi 0, %s69
      %s73 = sphi 0, %s72
      %s89 = sphi 0, %s73
      %s95 = sphi 0, %s97
      %s98 = sphi 0, %s95
      %s99 = sphi 0, %s98
      %s115 = sphi 0, %s99
    $region4: #{tpu_custom_call.1} parent=1 // loop_header_branch
      %15 = sbr.rel (%p13) target = $region8
    $region5: #{tpu_custom_call.1} parent=1 // loop_body
      %s17 = ssub.s32 %s12, 1
      %s18 = ssub.s32 %s12, 2
      %s19 = sadd.s32 %s12, 1
      %s20 = ssub.s32 %s12, %s19
      %p21 = scmp.eq.s32.totalorder %s20, 0
      %s23 = sadd.s32 %s22, 1
      %s24 = scalar_select %p21, %s22, %s23
      %p27 = pneg %p21
      %p28 = scmp.eq.s32.totalorder %s12, 1
      %p29 = por %p27, %p28
      %p30 = scmp.ne.s32.totalorder %s22, %s25
      %p31 = scmp.eq.s32.totalorder %s12, 0
      %p32 = por %p30, %p31
      %p33 = scmp.ne.s32.totalorder %s22, %s25
      %p34 = scmp.eq.s32.totalorder %s17, 1
      %p35 = por %p33, %p34
      %p36 = scmp.ne.s32.totalorder %s25, %s26
      %p37 = scmp.eq.s32.totalorder %s17, 0
      %p38 = por %p36, %p37
      %p39 = scmp.ne.s32.totalorder %s25, %s26
      %p40 = scmp.eq.s32.totalorder %s18, 1
      %p41 = por %p39, %p40
      %p43 = scmp.ne.s32.totalorder %s26, %s42
      %p44 = scmp.eq.s32.totalorder %s18, 0
      %p45 = por %p43, %p44
      %s47 = sadd.s32 %s46, 1
      %p50 = scmp.eq.s32.totalorder %s12, 1
      %p51 = scmp.ne.s32.totalorder %s46, %s48
      %p52 = scmp.eq.s32.totalorder %s12, 0
      %p53 = por %p51, %p52
      %p54 = scmp.ne.s32.totalorder %s46, %s48
      %p55 = scmp.eq.s32.totalorder %s17, 1
      %p56 = por %p54, %p55
      %p57 = scmp.ne.s32.totalorder %s48, %s49
      %p58 = scmp.eq.s32.totalorder %s17, 0
      %p59 = por %p57, %p58
      %p60 = scmp.ne.s32.totalorder %s48, %s49
      %p61 = scmp.eq.s32.totalorder %s18, 1
      %p62 = por %p60, %p61
      %p64 = scmp.ne.s32.totalorder %s49, %s63
      %p65 = scmp.eq.s32.totalorder %s18, 0
      %p66 = por %p64, %p65
      %s67 = ssub.s32 %s12, %s19
      %p68 = scmp.eq.s32.totalorder %s67, 0
      %s70 = sadd.s32 %s69, 1
      %s71 = scalar_select %p68, %s69, %s70
      %p74 = pneg %p68
      %p75 = scmp.eq.s32.totalorder %s12, 1
      %p76 = por %p74, %p75
      %p77 = scmp.ne.s32.totalorder %s69, %s72
      %p78 = scmp.eq.s32.totalorder %s12, 0
      %p79 = por %p77, %p78
      %p80 = scmp.ne.s32.totalorder %s69, %s72
      %p81 = scmp.eq.s32.totalorder %s17, 1
      %p82 = por %p80, %p81
      %p83 = scmp.ne.s32.totalorder %s72, %s73
      %p84 = scmp.eq.s32.totalorder %s17, 0
      %p85 = por %p83, %p84
      %p86 = scmp.ne.s32.totalorder %s72, %s73
      %p87 = scmp.eq.s32.totalorder %s18, 1
      %p88 = por %p86, %p87
      %p90 = scmp.ne.s32.totalorder %s73, %s89
      %p91 = scmp.eq.s32.totalorder %s18, 0
      %p92 = por %p90, %p91
      %s93 = ssub.s32 %s12, %s19
      %p94 = scmp.eq.s32.totalorder %s93, 0
      %s96 = sadd.s32 %s95, 1
      %s97 = scalar_select %p94, %s95, %s96
      %p100 = pneg %p94
      %p101 = scmp.eq.s32.totalorder %s12, 1
      %p102 = por %p100, %p101
      %p103 = scmp.ne.s32.totalorder %s95, %s98
      %p104 = scmp.eq.s32.totalorder %s12, 0
      %p105 = por %p103, %p104
      %p106 = scmp.ne.s32.totalorder %s95, %s98
      %p107 = scmp.eq.s32.totalorder %s17, 1
      %p108 = por %p106, %p107
      %p109 = scmp.ne.s32.totalorder %s98, %s99
      %p110 = scmp.eq.s32.totalorder %s17, 0
      %p111 = por %p109, %p110
      %p112 = scmp.ne.s32.totalorder %s98, %s99
      %p113 = scmp.eq.s32.totalorder %s18, 1
      %p114 = por %p112, %p113
      %p116 = scmp.ne.s32.totalorder %s99, %s115
      %p117 = scmp.eq.s32.totalorder %s18, 0
      %p118 = por %p116, %p117
      %p119 = scmp.le.s32.totalorder 1, %s12
      %p120 = scmp.lt.s32.totalorder %s12, 3
      %p121 = pnand %p119, %p120
      %p122 = pneg %p121
      // Predicated region
      $region9: #{tpu_custom_call.1} parent=5 // pred_check
        _
      $region10: #{tpu_custom_call.1} parent=5 // pred_check_branch
        %124 = sbr.rel (%p121) target = $region12
      $region11: #{tpu_custom_call.1} parent=5 // pred_region
        %s125 = ssub.s32 %s12, 1
        // Predicated region
        $region13: #{tpu_custom_call.1} parent=11 // pred_check
          %p126 = pneg %p59
        $region14: #{tpu_custom_call.1} parent=11 // pred_check_branch
          %128 = sbr.rel (%p126) target = $region16
        $region15: #{tpu_custom_call.1} parent=11 // pred_region
          _
        $region16: #{tpu_custom_call.1} parent=11 // pred_fallthru
          _
      $region12: #{tpu_custom_call.1} parent=5 // pred_fallthru
        _
      %p129 = scmp.lt.s32.totalorder %s12, 2
      // Predicated region
      $region17: #{tpu_custom_call.1} parent=5 // pred_check
        %p130 = pneg %p129
      $region18: #{tpu_custom_call.1} parent=5 // pred_check_branch
        %132 = sbr.rel (%p130) target = $region20
      $region19: #{tpu_custom_call.1} parent=5 // pred_region
        // Predicated region
        $region21: #{tpu_custom_call.1} parent=19 // pred_check
          %p133 = pneg %p32
        $region22: #{tpu_custom_call.1} parent=19 // pred_check_branch
          %135 = sbr.rel (%p133) target = $region24
        $region23: #{tpu_custom_call.1} parent=19 // pred_region
          %s136 = sand.u32 %s22, 1
          %s137 = scalar_lea.sflag [#allocation3], %s136
          %s138 = sand.u32 %s22, 1
          %s139 = smul.addr %s138, 1024
          %s140 = scalar_lea.vmem [#allocation2], %s139
          %s141 = smul.u32 64, %s12
          %143 = vsyncadd %s137, 0
          %s144 = smul.addr %s141, 2
          %s145 = smul.addr %s144, 8
          %s146 = scalar_lea.hbm %s0, %s145
          %s147 = sshll.u32 %s146, 4
          %s148 = int_to_ptr.hbm [resolvable:$true] %s147
          %s149 = sshll.u32 %s140, 4
          %s150 = int_to_ptr.vmem [resolvable:$true] %s149
          %155 = dma.hbm_to_vmem [thread:$0]  %s148, 16384, %s150, %s137, 256, 256, 16
        $region24: #{tpu_custom_call.1} parent=19 // pred_fallthru
          _
        // Predicated region
        $region25: #{tpu_custom_call.1} parent=19 // pred_check
          %p156 = pneg %p79
        $region26: #{tpu_custom_call.1} parent=19 // pred_check_branch
          %158 = sbr.rel (%p156) target = $region28
        $region27: #{tpu_custom_call.1} parent=19 // pred_region
          %s159 = smul.u32 64, %s12
          %p160 = scmp.lt.s32.totalorder %s159, 127
          %s161 = scalar_select %p160, %s159, 127
          %s162 = smul.addr %s161, 8
          %s163 = scalar_lea.vmem %s2, %s162
          %s164 = smul.u32 64, %s12
        $region28: #{tpu_custom_call.1} parent=19 // pred_fallthru
          _
      $region20: #{tpu_custom_call.1} parent=5 // pred_fallthru
        _
      %p165 = scmp.le.s32.totalorder 1, %s12
      %p166 = scmp.lt.s32.totalorder %s12, 3
      %p167 = pnand %p165, %p166
      %p168 = pneg %p167
      // Predicated region
      $region29: #{tpu_custom_call.1} parent=5 // pred_check
        _
      $region30: #{tpu_custom_call.1} parent=5 // pred_check_branch
        %170 = sbr.rel (%p167) target = $region32
      $region31: #{tpu_custom_call.1} parent=5 // pred_region
        %s171 = ssub.s32 %s12, 1
        %s172 = sand.u32 %s25, 1
        %s173 = scalar_lea.sflag [#allocation3], %s172
        %s174 = sand.u32 %s25, 1
        %s175 = smul.addr %s174, 1024
        %s176 = scalar_lea.vmem [#allocation2], %s175
        // Predicated region
        $region33: #{tpu_custom_call.1} parent=31 // pred_check
          %p177 = pneg %p38
        $region34: #{tpu_custom_call.1} parent=31 // pred_check_branch
          %179 = sbr.rel (%p177) target = $region36
        $region35: #{tpu_custom_call.1} parent=31 // pred_region
          %181 = dma.done %s173, 16384
        $region36: #{tpu_custom_call.1} parent=31 // pred_fallthru
          _
        %s182 = sand.u32 %s25, 1
        %s183 = scalar_lea.sflag [#allocation3], %s182
        %s184 = sand.u32 %s25, 1
        %s185 = smul.addr %s184, 1024
        %s186 = scalar_lea.vmem [#allocation2], %s185
        %p187 = pneg %p38
        %p188 = pneg %p35
        %p189 = pneg %p59
        %p190 = pneg %p56
        %s191 = smul.u32 64, %s17
        %p192 = scmp.lt.s32.totalorder %s191, 127
        %s193 = scalar_select %p192, %s191, 127
        %s194 = smul.addr %s193, 8
        %s195 = scalar_lea.vmem %s2, %s194
        %p196 = pneg %p85
        %p197 = pneg %p82
        %p198 = pneg %p111
        %p199 = pneg %p108
        %s200 = smul.u32 64, %s17
        %p201 = scmp.lt.s32.totalorder %s200, 127
        %s202 = scalar_select %p201, %s200, 127
        %s203 = smul.addr %s202, 8
        %s204 = scalar_lea.vmem %s3, %s203
        %s205 = smul.u32 64, %s17
        %s206 = smul.u32 64, %s17
        %p207 = scmp.lt.s32.totalorder %s206, 127
        %s208 = scalar_select %p207, %s206, 127
        %s209 = smul.addr %s208, 8
        %s210 = scalar_lea.vmem %s2, %s209
        %s211 = smul.u32 64, %s17
        %s212 = smul.u32 64, %s17
        %p213 = scmp.lt.s32.totalorder %s212, 127
        %s214 = scalar_select %p213, %s212, 127
        %s215 = smul.addr %s214, 8
        %s216 = scalar_lea.vmem %s3, %s215
        %s217 = smul.u32 64, %s17
        %v218 = vld [vmem:[%s176] sm:$0xff]
        %v219 = vld [vmem:[%s176 + $0x8] sm:$0xff]
        %v220 = vld [vmem:[%s176 + $0x10] sm:$0xff]
        %v221 = vld [vmem:[%s176 + $0x18] sm:$0xff]
        %v222 = vld [vmem:[%s176 + $0x20] sm:$0xff]
        %v223 = vld [vmem:[%s176 + $0x28] sm:$0xff]
        %v224 = vld [vmem:[%s176 + $0x30] sm:$0xff]
        %v225 = vld [vmem:[%s176 + $0x38] sm:$0xff]
        %v226 = vld [vmem:[%s176 + $0x40] sm:$0xff]
        %v227 = vld [vmem:[%s176 + $0x48] sm:$0xff]
        %v228 = vld [vmem:[%s176 + $0x50] sm:$0xff]
        %v229 = vld [vmem:[%s176 + $0x58] sm:$0xff]
        %v230 = vld [vmem:[%s176 + $0x60] sm:$0xff]
        %v231 = vld [vmem:[%s176 + $0x68] sm:$0xff]
        %v232 = vld [vmem:[%s176 + $0x70] sm:$0xff]
        %v233 = vld [vmem:[%s176 + $0x78] sm:$0xff]
        %v234 = vld [vmem:[%s176 + $0x80] sm:$0xff]
        %v235 = vld [vmem:[%s176 + $0x88] sm:$0xff]
        %v236 = vld [vmem:[%s176 + $0x90] sm:$0xff]
        %v237 = vld [vmem:[%s176 + $0x98] sm:$0xff]
        %v238 = vld [vmem:[%s176 + $0xa0] sm:$0xff]
        %v239 = vld [vmem:[%s176 + $0xa8] sm:$0xff]
        %v240 = vld [vmem:[%s176 + $0xb0] sm:$0xff]
        %v241 = vld [vmem:[%s176 + $0xb8] sm:$0xff]
        %v242 = vld [vmem:[%s176 + $0xc0] sm:$0xff]
        %v243 = vld [vmem:[%s176 + $0xc8] sm:$0xff]
        %v244 = vld [vmem:[%s176 + $0xd0] sm:$0xff]
        %v245 = vld [vmem:[%s176 + $0xd8] sm:$0xff]
        %v246 = vld [vmem:[%s176 + $0xe0] sm:$0xff]
        %v247 = vld [vmem:[%s176 + $0xe8] sm:$0xff]
        %v248 = vld [vmem:[%s176 + $0xf0] sm:$0xff]
        %v249 = vld [vmem:[%s176 + $0xf8] sm:$0xff]
        %v250 = vld [vmem:[%s176 + $0x100] sm:$0xff]
        %v251 = vld [vmem:[%s176 + $0x108] sm:$0xff]
        %v252 = vld [vmem:[%s176 + $0x110] sm:$0xff]
        %v253 = vld [vmem:[%s176 + $0x118] sm:$0xff]
        %v254 = vld [vmem:[%s176 + $0x120] sm:$0xff]
        %v255 = vld [vmem:[%s176 + $0x128] sm:$0xff]
        %v256 = vld [vmem:[%s176 + $0x130] sm:$0xff]
        %v257 = vld [vmem:[%s176 + $0x138] sm:$0xff]
        %v258 = vld [vmem:[%s176 + $0x140] sm:$0xff]
        %v259 = vld [vmem:[%s176 + $0x148] sm:$0xff]
        %v260 = vld [vmem:[%s176 + $0x150] sm:$0xff]
        %v261 = vld [vmem:[%s176 + $0x158] sm:$0xff]
        %v262 = vld [vmem:[%s176 + $0x160] sm:$0xff]
        %v263 = vld [vmem:[%s176 + $0x168] sm:$0xff]
        %v264 = vld [vmem:[%s176 + $0x170] sm:$0xff]
        %v265 = vld [vmem:[%s176 + $0x178] sm:$0xff]
        %v266 = vld [vmem:[%s176 + $0x180] sm:$0xff]
        %v267 = vld [vmem:[%s176 + $0x188] sm:$0xff]
        %v268 = vld [vmem:[%s176 + $0x190] sm:$0xff]
        %v269 = vld [vmem:[%s176 + $0x198] sm:$0xff]
        %v270 = vld [vmem:[%s176 + $0x1a0] sm:$0xff]
        %v271 = vld [vmem:[%s176 + $0x1a8] sm:$0xff]
        %v272 = vld [vmem:[%s176 + $0x1b0] sm:$0xff]
        %v273 = vld [vmem:[%s176 + $0x1b8] sm:$0xff]
        %v274 = vld [vmem:[%s176 + $0x1c0] sm:$0xff]
        %v275 = vld [vmem:[%s176 + $0x1c8] sm:$0xff]
        %v276 = vld [vmem:[%s176 + $0x1d0] sm:$0xff]
        %v277 = vld [vmem:[%s176 + $0x1d8] sm:$0xff]
        %v278 = vld [vmem:[%s176 + $0x1e0] sm:$0xff]
        %v279 = vld [vmem:[%s176 + $0x1e8] sm:$0xff]
        %v280 = vld [vmem:[%s176 + $0x1f0] sm:$0xff]
        %v281 = vld [vmem:[%s176 + $0x1f8] sm:$0xff]
        %v282 = vld [vmem:[%s176 + $0x200] sm:$0xff]
        %v283 = vld [vmem:[%s176 + $0x208] sm:$0xff]
        %v284 = vld [vmem:[%s176 + $0x210] sm:$0xff]
        %v285 = vld [vmem:[%s176 + $0x218] sm:$0xff]
        %v286 = vld [vmem:[%s176 + $0x220] sm:$0xff]
        %v287 = vld [vmem:[%s176 + $0x228] sm:$0xff]
        %v288 = vld [vmem:[%s176 + $0x230] sm:$0xff]
        %v289 = vld [vmem:[%s176 + $0x238] sm:$0xff]
        %v290 = vld [vmem:[%s176 + $0x240] sm:$0xff]
        %v291 = vld [vmem:[%s176 + $0x248] sm:$0xff]
        %v292 = vld [vmem:[%s176 + $0x250] sm:$0xff]
        %v293 = vld [vmem:[%s176 + $0x258] sm:$0xff]
        %v294 = vld [vmem:[%s176 + $0x260] sm:$0xff]
        %v295 = vld [vmem:[%s176 + $0x268] sm:$0xff]
        %v296 = vld [vmem:[%s176 + $0x270] sm:$0xff]
        %v297 = vld [vmem:[%s176 + $0x278] sm:$0xff]
        %v298 = vld [vmem:[%s176 + $0x280] sm:$0xff]
        %v299 = vld [vmem:[%s176 + $0x288] sm:$0xff]
        %v300 = vld [vmem:[%s176 + $0x290] sm:$0xff]
        %v301 = vld [vmem:[%s176 + $0x298] sm:$0xff]
        %v302 = vld [vmem:[%s176 + $0x2a0] sm:$0xff]
        %v303 = vld [vmem:[%s176 + $0x2a8] sm:$0xff]
        %v304 = vld [vmem:[%s176 + $0x2b0] sm:$0xff]
        %v305 = vld [vmem:[%s176 + $0x2b8] sm:$0xff]
        %v306 = vld [vmem:[%s176 + $0x2c0] sm:$0xff]
        %v307 = vld [vmem:[%s176 + $0x2c8] sm:$0xff]
        %v308 = vld [vmem:[%s176 + $0x2d0] sm:$0xff]
        %v309 = vld [vmem:[%s176 + $0x2d8] sm:$0xff]
        %v310 = vld [vmem:[%s176 + $0x2e0] sm:$0xff]
        %v311 = vld [vmem:[%s176 + $0x2e8] sm:$0xff]
        %v312 = vld [vmem:[%s176 + $0x2f0] sm:$0xff]
        %v313 = vld [vmem:[%s176 + $0x2f8] sm:$0xff]
        %v314 = vld [vmem:[%s176 + $0x300] sm:$0xff]
        %v315 = vld [vmem:[%s176 + $0x308] sm:$0xff]
        %v316 = vld [vmem:[%s176 + $0x310] sm:$0xff]
        %v317 = vld [vmem:[%s176 + $0x318] sm:$0xff]
        %v318 = vld [vmem:[%s176 + $0x320] sm:$0xff]
        %v319 = vld [vmem:[%s176 + $0x328] sm:$0xff]
        %v320 = vld [vmem:[%s176 + $0x330] sm:$0xff]
        %v321 = vld [vmem:[%s176 + $0x338] sm:$0xff]
        %v322 = vld [vmem:[%s176 + $0x340] sm:$0xff]
        %v323 = vld [vmem:[%s176 + $0x348] sm:$0xff]
        %v324 = vld [vmem:[%s176 + $0x350] sm:$0xff]
        %v325 = vld [vmem:[%s176 + $0x358] sm:$0xff]
        %v326 = vld [vmem:[%s176 + $0x360] sm:$0xff]
        %v327 = vld [vmem:[%s176 + $0x368] sm:$0xff]
        %v328 = vld [vmem:[%s176 + $0x370] sm:$0xff]
        %v329 = vld [vmem:[%s176 + $0x378] sm:$0xff]
        %v330 = vld [vmem:[%s176 + $0x380] sm:$0xff]
        %v331 = vld [vmem:[%s176 + $0x388] sm:$0xff]
        %v332 = vld [vmem:[%s176 + $0x390] sm:$0xff]
        %v333 = vld [vmem:[%s176 + $0x398] sm:$0xff]
        %v334 = vld [vmem:[%s176 + $0x3a0] sm:$0xff]
        %v335 = vld [vmem:[%s176 + $0x3a8] sm:$0xff]
        %v336 = vld [vmem:[%s176 + $0x3b0] sm:$0xff]
        %v337 = vld [vmem:[%s176 + $0x3b8] sm:$0xff]
        %v338 = vld [vmem:[%s176 + $0x3c0] sm:$0xff]
        %v339 = vld [vmem:[%s176 + $0x3c8] sm:$0xff]
        %v340 = vld [vmem:[%s176 + $0x3d0] sm:$0xff]
        %v341 = vld [vmem:[%s176 + $0x3d8] sm:$0xff]
        %v342 = vld [vmem:[%s176 + $0x3e0] sm:$0xff]
        %v343 = vld [vmem:[%s176 + $0x3e8] sm:$0xff]
        %v344 = vld [vmem:[%s176 + $0x3f0] sm:$0xff]
        %v345 = vld [vmem:[%s176 + $0x3f8] sm:$0xff]
        %v346 = vld [vmem:[%s1] sm:$0xff]
        %v347 = vld [vmem:[%s1 + $0x8] sm:$0xff]
        %v348 = vld [vmem:[%s1 + $0x10] sm:$0xff]
        %v349 = vld [vmem:[%s1 + $0x18] sm:$0xff]
        %v350 = vld [vmem:[%s1 + $0x20] sm:$0xff]
        %v351 = vld [vmem:[%s1 + $0x28] sm:$0xff]
        %v352 = vld [vmem:[%s1 + $0x30] sm:$0xff]
        %v353 = vld [vmem:[%s1 + $0x38] sm:$0xff]
        %v354 = vld [vmem:[%s1 + $0x40] sm:$0xff]
        %v355 = vld [vmem:[%s1 + $0x48] sm:$0xff]
        %v356 = vld [vmem:[%s1 + $0x50] sm:$0xff]
        %v357 = vld [vmem:[%s1 + $0x58] sm:$0xff]
        %v358 = vld [vmem:[%s1 + $0x60] sm:$0xff]
        %v359 = vld [vmem:[%s1 + $0x68] sm:$0xff]
        %v360 = vld [vmem:[%s1 + $0x70] sm:$0xff]
        %v361 = vld [vmem:[%s1 + $0x78] sm:$0xff]
        %v362 = vld [vmem:[%s1 + $0x80] sm:$0xff]
        %v363 = vld [vmem:[%s1 + $0x88] sm:$0xff]
        %v364 = vld [vmem:[%s1 + $0x90] sm:$0xff]
        %v365 = vld [vmem:[%s1 + $0x98] sm:$0xff]
        %v366 = vld [vmem:[%s1 + $0xa0] sm:$0xff]
        %v367 = vld [vmem:[%s1 + $0xa8] sm:$0xff]
        %v368 = vld [vmem:[%s1 + $0xb0] sm:$0xff]
        %v369 = vld [vmem:[%s1 + $0xb8] sm:$0xff]
        %v370 = vld [vmem:[%s1 + $0xc0] sm:$0xff]
        %v371 = vld [vmem:[%s1 + $0xc8] sm:$0xff]
        %v372 = vld [vmem:[%s1 + $0xd0] sm:$0xff]
        %v373 = vld [vmem:[%s1 + $0xd8] sm:$0xff]
        %v374 = vld [vmem:[%s1 + $0xe0] sm:$0xff]
        %v375 = vld [vmem:[%s1 + $0xe8] sm:$0xff]
        %v376 = vld [vmem:[%s1 + $0xf0] sm:$0xff]
        %v377 = vld [vmem:[%s1 + $0xf8] sm:$0xff]
        %v378 = vld [vmem:[%s1 + $0x100] sm:$0xff]
        %v379 = vld [vmem:[%s1 + $0x108] sm:$0xff]
        %v380 = vld [vmem:[%s1 + $0x110] sm:$0xff]
        %v381 = vld [vmem:[%s1 + $0x118] sm:$0xff]
        %v382 = vld [vmem:[%s1 + $0x120] sm:$0xff]
        %v383 = vld [vmem:[%s1 + $0x128] sm:$0xff]
        %v384 = vld [vmem:[%s1 + $0x130] sm:$0xff]
        %v385 = vld [vmem:[%s1 + $0x138] sm:$0xff]
        %v386 = vld [vmem:[%s1 + $0x140] sm:$0xff]
        %v387 = vld [vmem:[%s1 + $0x148] sm:$0xff]
        %v388 = vld [vmem:[%s1 + $0x150] sm:$0xff]
        %v389 = vld [vmem:[%s1 + $0x158] sm:$0xff]
        %v390 = vld [vmem:[%s1 + $0x160] sm:$0xff]
        %v391 = vld [vmem:[%s1 + $0x168] sm:$0xff]
        %v392 = vld [vmem:[%s1 + $0x170] sm:$0xff]
        %v393 = vld [vmem:[%s1 + $0x178] sm:$0xff]
        %v394 = vld [vmem:[%s1 + $0x180] sm:$0xff]
        %v395 = vld [vmem:[%s1 + $0x188] sm:$0xff]
        %v396 = vld [vmem:[%s1 + $0x190] sm:$0xff]
        %v397 = vld [vmem:[%s1 + $0x198] sm:$0xff]
        %v398 = vld [vmem:[%s1 + $0x1a0] sm:$0xff]
        %v399 = vld [vmem:[%s1 + $0x1a8] sm:$0xff]
        %v400 = vld [vmem:[%s1 + $0x1b0] sm:$0xff]
        %v401 = vld [vmem:[%s1 + $0x1b8] sm:$0xff]
        %v402 = vld [vmem:[%s1 + $0x1c0] sm:$0xff]
        %v403 = vld [vmem:[%s1 + $0x1c8] sm:$0xff]
        %v404 = vld [vmem:[%s1 + $0x1d0] sm:$0xff]
        %v405 = vld [vmem:[%s1 + $0x1d8] sm:$0xff]
        %v406 = vld [vmem:[%s1 + $0x1e0] sm:$0xff]
        %v407 = vld [vmem:[%s1 + $0x1e8] sm:$0xff]
        %v408 = vld [vmem:[%s1 + $0x1f0] sm:$0xff]
        %v409 = vld [vmem:[%s1 + $0x1f8] sm:$0xff]
        %410 = vmatpush.msra.mxu0 %v376
        %411 = vmatpush.msra.mxu0 %v374
        %412 = vmatpush.msra.mxu0 %v372
        %413 = vmatpush.msra.mxu0 %v370
        %414 = vmatpush.msra.mxu0 %v368
        %415 = vmatpush.msra.mxu0 %v366
        %416 = vmatpush.msra.mxu0 %v364
        %417 = vmatpush.msra.mxu0 %v362
        %418 = vmatpush.msra.mxu0 %v360
        %419 = vmatpush.msra.mxu0 %v358
        %420 = vmatpush.msra.mxu0 %v356
        %421 = vmatpush.msra.mxu0 %v354
        %422 = vmatpush.msra.mxu0 %v352
        %423 = vmatpush.msra.mxu0 %v350
        %424 = vmatpush.msra.mxu0 %v348
        %425 = vmatpush.msra.mxu0 %v346
        %426 = vmatmul.f32.gmra.mxu0 %v218
        %v427 = vpop.f32.mrf.mxu0
        %v428 = vadd.f32 0.0, %v427
        %429 = vmatmul.f32.gmra.mxu0 %v220
        %v430 = vpop.f32.mrf.mxu0
        %v431 = vadd.f32 0.0, %v430
        %432 = vmatmul.f32.gmra.mxu0 %v222
        %v433 = vpop.f32.mrf.mxu0
        %v434 = vadd.f32 0.0, %v433
        %435 = vmatmul.f32.gmra.mxu0 %v224
        %v436 = vpop.f32.mrf.mxu0
        %v437 = vadd.f32 0.0, %v436
        %438 = vmatmul.f32.gmra.mxu0 %v226
        %v439 = vpop.f32.mrf.mxu0
        %v440 = vadd.f32 0.0, %v439
        %441 = vmatmul.f32.gmra.mxu0 %v228
        %v442 = vpop.f32.mrf.mxu0
        %v443 = vadd.f32 0.0, %v442
        %444 = vmatmul.f32.gmra.mxu0 %v230
        %v445 = vpop.f32.mrf.mxu0
        %v446 = vadd.f32 0.0, %v445
        %447 = vmatmul.f32.gmra.mxu0 %v232
        %v448 = vpop.f32.mrf.mxu0
        %v449 = vadd.f32 0.0, %v448
        %450 = vmatmul.f32.gmra.mxu0 %v234
        %v451 = vpop.f32.mrf.mxu0
        %v452 = vadd.f32 0.0, %v451
        %453 = vmatmul.f32.gmra.mxu0 %v236
        %v454 = vpop.f32.mrf.mxu0
        %v455 = vadd.f32 0.0, %v454
        %456 = vmatmul.f32.gmra.mxu0 %v238
        %v457 = vpop.f32.mrf.mxu0
        %v458 = vadd.f32 0.0, %v457
        %459 = vmatmul.f32.gmra.mxu0 %v240
        %v460 = vpop.f32.mrf.mxu0
        %v461 = vadd.f32 0.0, %v460
        %462 = vmatmul.f32.gmra.mxu0 %v242
        %v463 = vpop.f32.mrf.mxu0
        %v464 = vadd.f32 0.0, %v463
        %465 = vmatmul.f32.gmra.mxu0 %v244
        %v466 = vpop.f32.mrf.mxu0
        %v467 = vadd.f32 0.0, %v466
        %468 = vmatmul.f32.gmra.mxu0 %v246
        %v469 = vpop.f32.mrf.mxu0
        %v470 = vadd.f32 0.0, %v469
        %471 = vmatmul.f32.gmra.mxu0 %v248
        %v472 = vpop.f32.mrf.mxu0
        %v473 = vadd.f32 0.0, %v472
        %474 = vmatmul.f32.gmra.mxu0 %v250
        %v475 = vpop.f32.mrf.mxu0
        %v476 = vadd.f32 0.0, %v475
        %477 = vmatmul.f32.gmra.mxu0 %v252
        %v478 = vpop.f32.mrf.mxu0
        %v479 = vadd.f32 0.0, %v478
        %480 = vmatmul.f32.gmra.mxu0 %v254
        %v481 = vpop.f32.mrf.mxu0
        %v482 = vadd.f32 0.0, %v481
        %483 = vmatmul.f32.gmra.mxu0 %v256
        %v484 = vpop.f32.mrf.mxu0
        %v485 = vadd.f32 0.0, %v484
        %486 = vmatmul.f32.gmra.mxu0 %v258
        %v487 = vpop.f32.mrf.mxu0
        %v488 = vadd.f32 0.0, %v487
        %489 = vmatmul.f32.gmra.mxu0 %v260
        %v490 = vpop.f32.mrf.mxu0
        %v491 = vadd.f32 0.0, %v490
        %492 = vmatmul.f32.gmra.mxu0 %v262
        %v493 = vpop.f32.mrf.mxu0
        %v494 = vadd.f32 0.0, %v493
        %495 = vmatmul.f32.gmra.mxu0 %v264
        %v496 = vpop.f32.mrf.mxu0
        %v497 = vadd.f32 0.0, %v496
        %498 = vmatmul.f32.gmra.mxu0 %v266
        %v499 = vpop.f32.mrf.mxu0
        %v500 = vadd.f32 0.0, %v499
        %501 = vmatmul.f32.gmra.mxu0 %v268
        %v502 = vpop.f32.mrf.mxu0
        %v503 = vadd.f32 0.0, %v502
        %504 = vmatmul.f32.gmra.mxu0 %v270
        %v505 = vpop.f32.mrf.mxu0
        %v506 = vadd.f32 0.0, %v505
        %507 = vmatmul.f32.gmra.mxu0 %v272
        %v508 = vpop.f32.mrf.mxu0
        %v509 = vadd.f32 0.0, %v508
        %510 = vmatmul.f32.gmra.mxu0 %v274
        %v511 = vpop.f32.mrf.mxu0
        %v512 = vadd.f32 0.0, %v511
        %513 = vmatmul.f32.gmra.mxu0 %v276
        %v514 = vpop.f32.mrf.mxu0
        %v515 = vadd.f32 0.0, %v514
        %516 = vmatmul.f32.gmra.mxu0 %v278
        %v517 = vpop.f32.mrf.mxu0
        %v518 = vadd.f32 0.0, %v517
        %519 = vmatmul.f32.gmra.mxu0 %v280
        %v520 = vpop.f32.mrf.mxu0
        %v521 = vadd.f32 0.0, %v520
        %522 = vmatmul.f32.gmra.mxu0 %v282
        %v523 = vpop.f32.mrf.mxu0
        %v524 = vadd.f32 0.0, %v523
        %525 = vmatmul.f32.gmra.mxu0 %v284
        %v526 = vpop.f32.mrf.mxu0
        %v527 = vadd.f32 0.0, %v526
        %528 = vmatmul.f32.gmra.mxu0 %v286
        %v529 = vpop.f32.mrf.mxu0
        %v530 = vadd.f32 0.0, %v529
        %531 = vmatmul.f32.gmra.mxu0 %v288
        %v532 = vpop.f32.mrf.mxu0
        %v533 = vadd.f32 0.0, %v532
        %534 = vmatmul.f32.gmra.mxu0 %v290
        %v535 = vpop.f32.mrf.mxu0
        %v536 = vadd.f32 0.0, %v535
        %537 = vmatmul.f32.gmra.mxu0 %v292
        %v538 = vpop.f32.mrf.mxu0
        %v539 = vadd.f32 0.0, %v538
        %540 = vmatmul.f32.gmra.mxu0 %v294
        %v541 = vpop.f32.mrf.mxu0
        %v542 = vadd.f32 0.0, %v541
        %543 = vmatmul.f32.gmra.mxu0 %v296
        %v544 = vpop.f32.mrf.mxu0
        %v545 = vadd.f32 0.0, %v544
        %546 = vmatmul.f32.gmra.mxu0 %v298
        %v547 = vpop.f32.mrf.mxu0
        %v548 = vadd.f32 0.0, %v547
        %549 = vmatmul.f32.gmra.mxu0 %v300
        %v550 = vpop.f32.mrf.mxu0
        %v551 = vadd.f32 0.0, %v550
        %552 = vmatmul.f32.gmra.mxu0 %v302
        %v553 = vpop.f32.mrf.mxu0
        %v554 = vadd.f32 0.0, %v553
        %555 = vmatmul.f32.gmra.mxu0 %v304
        %v556 = vpop.f32.mrf.mxu0
        %v557 = vadd.f32 0.0, %v556
        %558 = vmatmul.f32.gmra.mxu0 %v306
        %v559 = vpop.f32.mrf.mxu0
        %v560 = vadd.f32 0.0, %v559
        %561 = vmatmul.f32.gmra.mxu0 %v308
        %v562 = vpop.f32.mrf.mxu0
        %v563 = vadd.f32 0.0, %v562
        %564 = vmatmul.f32.gmra.mxu0 %v310
        %v565 = vpop.f32.mrf.mxu0
        %v566 = vadd.f32 0.0, %v565
        %567 = vmatmul.f32.gmra.mxu0 %v312
        %v568 = vpop.f32.mrf.mxu0
        %v569 = vadd.f32 0.0, %v568
        %570 = vmatmul.f32.gmra.mxu0 %v314
        %v571 = vpop.f32.mrf.mxu0
        %v572 = vadd.f32 0.0, %v571
        %573 = vmatmul.f32.gmra.mxu0 %v316
        %v574 = vpop.f32.mrf.mxu0
        %v575 = vadd.f32 0.0, %v574
        %576 = vmatmul.f32.gmra.mxu0 %v318
        %v577 = vpop.f32.mrf.mxu0
        %v578 = vadd.f32 0.0, %v577
        %579 = vmatmul.f32.gmra.mxu0 %v320
        %v580 = vpop.f32.mrf.mxu0
        %v581 = vadd.f32 0.0, %v580
        %582 = vmatmul.f32.gmra.mxu0 %v322
        %v583 = vpop.f32.mrf.mxu0
        %v584 = vadd.f32 0.0, %v583
        %585 = vmatmul.f32.gmra.mxu0 %v324
        %v586 = vpop.f32.mrf.mxu0
        %v587 = vadd.f32 0.0, %v586
        %588 = vmatmul.f32.gmra.mxu0 %v326
        %v589 = vpop.f32.mrf.mxu0
        %v590 = vadd.f32 0.0, %v589
        %591 = vmatmul.f32.gmra.mxu0 %v328
        %v592 = vpop.f32.mrf.mxu0
        %v593 = vadd.f32 0.0, %v592
        %594 = vmatmul.f32.gmra.mxu0 %v330
        %v595 = vpop.f32.mrf.mxu0
        %v596 = vadd.f32 0.0, %v595
        %597 = vmatmul.f32.gmra.mxu0 %v332
        %v598 = vpop.f32.mrf.mxu0
        %v599 = vadd.f32 0.0, %v598
        %600 = vmatmul.f32.gmra.mxu0 %v334
        %v601 = vpop.f32.mrf.mxu0
        %v602 = vadd.f32 0.0, %v601
        %603 = vmatmul.f32.gmra.mxu0 %v336
        %v604 = vpop.f32.mrf.mxu0
        %v605 = vadd.f32 0.0, %v604
        %606 = vmatmul.f32.gmra.mxu0 %v338
        %v607 = vpop.f32.mrf.mxu0
        %v608 = vadd.f32 0.0, %v607
        %609 = vmatmul.f32.gmra.mxu0 %v340
        %v610 = vpop.f32.mrf.mxu0
        %v611 = vadd.f32 0.0, %v610
        %612 = vmatmul.f32.gmra.mxu0 %v342
        %v613 = vpop.f32.mrf.mxu0
        %v614 = vadd.f32 0.0, %v613
        %615 = vmatmul.f32.gmra.mxu0 %v344
        %v616 = vpop.f32.mrf.mxu0
        %v617 = vadd.f32 0.0, %v616
        %618 = vdwg.mxu0
        %619 = vmatpush.msra.mxu0 %v408
        %620 = vmatpush.msra.mxu0 %v406
        %621 = vmatpush.msra.mxu0 %v404
        %622 = vmatpush.msra.mxu0 %v402
        %623 = vmatpush.msra.mxu0 %v400
        %624 = vmatpush.msra.mxu0 %v398
        %625 = vmatpush.msra.mxu0 %v396
        %626 = vmatpush.msra.mxu0 %v394
        %627 = vmatpush.msra.mxu0 %v392
        %628 = vmatpush.msra.mxu0 %v390
        %629 = vmatpush.msra.mxu0 %v388
        %630 = vmatpush.msra.mxu0 %v386
        %631 = vmatpush.msra.mxu0 %v384
        %632 = vmatpush.msra.mxu0 %v382
        %633 = vmatpush.msra.mxu0 %v380
        %634 = vmatpush.msra.mxu0 %v378
        %635 = vmatmul.f32.gmra.mxu0 %v219
        %v636 = vpop.f32.mrf.mxu0
        %v637 = vadd.f32 %v428, %v636
        %638 = vmatmul.f32.gmra.mxu0 %v221
        %v639 = vpop.f32.mrf.mxu0
        %v640 = vadd.f32 %v431, %v639
        %641 = vmatmul.f32.gmra.mxu0 %v223
        %v642 = vpop.f32.mrf.mxu0
        %v643 = vadd.f32 %v434, %v642
        %644 = vmatmul.f32.gmra.mxu0 %v225
        %v645 = vpop.f32.mrf.mxu0
        %v646 = vadd.f32 %v437, %v645
        %647 = vmatmul.f32.gmra.mxu0 %v227
        %v648 = vpop.f32.mrf.mxu0
        %v649 = vadd.f32 %v440, %v648
        %650 = vmatmul.f32.gmra.mxu0 %v229
        %v651 = vpop.f32.mrf.mxu0
        %v652 = vadd.f32 %v443, %v651
        %653 = vmatmul.f32.gmra.mxu0 %v231
        %v654 = vpop.f32.mrf.mxu0
        %v655 = vadd.f32 %v446, %v654
        %656 = vmatmul.f32.gmra.mxu0 %v233
        %v657 = vpop.f32.mrf.mxu0
        %v658 = vadd.f32 %v449, %v657
        %659 = vmatmul.f32.gmra.mxu0 %v235
        %v660 = vpop.f32.mrf.mxu0
        %v661 = vadd.f32 %v452, %v660
        %662 = vmatmul.f32.gmra.mxu0 %v237
        %v663 = vpop.f32.mrf.mxu0
        %v664 = vadd.f32 %v455, %v663
        %665 = vmatmul.f32.gmra.mxu0 %v239
        %v666 = vpop.f32.mrf.mxu0
        %v667 = vadd.f32 %v458, %v666
        %668 = vmatmul.f32.gmra.mxu0 %v241
        %v669 = vpop.f32.mrf.mxu0
        %v670 = vadd.f32 %v461, %v669
        %671 = vmatmul.f32.gmra.mxu0 %v243
        %v672 = vpop.f32.mrf.mxu0
        %v673 = vadd.f32 %v464, %v672
        %674 = vmatmul.f32.gmra.mxu0 %v245
        %v675 = vpop.f32.mrf.mxu0
        %v676 = vadd.f32 %v467, %v675
        %677 = vmatmul.f32.gmra.mxu0 %v247
        %v678 = vpop.f32.mrf.mxu0
        %v679 = vadd.f32 %v470, %v678
        %680 = vmatmul.f32.gmra.mxu0 %v249
        %v681 = vpop.f32.mrf.mxu0
        %v682 = vadd.f32 %v473, %v681
        %683 = vmatmul.f32.gmra.mxu0 %v251
        %v684 = vpop.f32.mrf.mxu0
        %v685 = vadd.f32 %v476, %v684
        %686 = vmatmul.f32.gmra.mxu0 %v253
        %v687 = vpop.f32.mrf.mxu0
        %v688 = vadd.f32 %v479, %v687
        %689 = vmatmul.f32.gmra.mxu0 %v255
        %v690 = vpop.f32.mrf.mxu0
        %v691 = vadd.f32 %v482, %v690
        %692 = vmatmul.f32.gmra.mxu0 %v257
        %v693 = vpop.f32.mrf.mxu0
        %v694 = vadd.f32 %v485, %v693
        %695 = vmatmul.f32.gmra.mxu0 %v259
        %v696 = vpop.f32.mrf.mxu0
        %v697 = vadd.f32 %v488, %v696
        %698 = vmatmul.f32.gmra.mxu0 %v261
        %v699 = vpop.f32.mrf.mxu0
        %v700 = vadd.f32 %v491, %v699
        %701 = vmatmul.f32.gmra.mxu0 %v263
        %v702 = vpop.f32.mrf.mxu0
        %v703 = vadd.f32 %v494, %v702
        %704 = vmatmul.f32.gmra.mxu0 %v265
        %v705 = vpop.f32.mrf.mxu0
        %v706 = vadd.f32 %v497, %v705
        %707 = vmatmul.f32.gmra.mxu0 %v267
        %v708 = vpop.f32.mrf.mxu0
        %v709 = vadd.f32 %v500, %v708
        %710 = vmatmul.f32.gmra.mxu0 %v269
        %v711 = vpop.f32.mrf.mxu0
        %v712 = vadd.f32 %v503, %v711
        %713 = vmatmul.f32.gmra.mxu0 %v271
        %v714 = vpop.f32.mrf.mxu0
        %v715 = vadd.f32 %v506, %v714
        %716 = vmatmul.f32.gmra.mxu0 %v273
        %v717 = vpop.f32.mrf.mxu0
        %v718 = vadd.f32 %v509, %v717
        %719 = vmatmul.f32.gmra.mxu0 %v275
        %v720 = vpop.f32.mrf.mxu0
        %v721 = vadd.f32 %v512, %v720
        %722 = vmatmul.f32.gmra.mxu0 %v277
        %v723 = vpop.f32.mrf.mxu0
        %v724 = vadd.f32 %v515, %v723
        %725 = vmatmul.f32.gmra.mxu0 %v279
        %v726 = vpop.f32.mrf.mxu0
        %v727 = vadd.f32 %v518, %v726
        %728 = vmatmul.f32.gmra.mxu0 %v281
        %v729 = vpop.f32.mrf.mxu0
        %v730 = vadd.f32 %v521, %v729
        %731 = vmatmul.f32.gmra.mxu0 %v283
        %v732 = vpop.f32.mrf.mxu0
        %v733 = vadd.f32 %v524, %v732
        %734 = vmatmul.f32.gmra.mxu0 %v285
        %v735 = vpop.f32.mrf.mxu0
        %v736 = vadd.f32 %v527, %v735
        %737 = vmatmul.f32.gmra.mxu0 %v287
        %v738 = vpop.f32.mrf.mxu0
        %v739 = vadd.f32 %v530, %v738
        %740 = vmatmul.f32.gmra.mxu0 %v289
        %v741 = vpop.f32.mrf.mxu0
        %v742 = vadd.f32 %v533, %v741
        %743 = vmatmul.f32.gmra.mxu0 %v291
        %v744 = vpop.f32.mrf.mxu0
        %v745 = vadd.f32 %v536, %v744
        %746 = vmatmul.f32.gmra.mxu0 %v293
        %v747 = vpop.f32.mrf.mxu0
        %v748 = vadd.f32 %v539, %v747
        %749 = vmatmul.f32.gmra.mxu0 %v295
        %v750 = vpop.f32.mrf.mxu0
        %v751 = vadd.f32 %v542, %v750
        %752 = vmatmul.f32.gmra.mxu0 %v297
        %v753 = vpop.f32.mrf.mxu0
        %v754 = vadd.f32 %v545, %v753
        %755 = vmatmul.f32.gmra.mxu0 %v299
        %v756 = vpop.f32.mrf.mxu0
        %v757 = vadd.f32 %v548, %v756
        %758 = vmatmul.f32.gmra.mxu0 %v301
        %v759 = vpop.f32.mrf.mxu0
        %v760 = vadd.f32 %v551, %v759
        %761 = vmatmul.f32.gmra.mxu0 %v303
        %v762 = vpop.f32.mrf.mxu0
        %v763 = vadd.f32 %v554, %v762
        %764 = vmatmul.f32.gmra.mxu0 %v305
        %v765 = vpop.f32.mrf.mxu0
        %v766 = vadd.f32 %v557, %v765
        %767 = vmatmul.f32.gmra.mxu0 %v307
        %v768 = vpop.f32.mrf.mxu0
        %v769 = vadd.f32 %v560, %v768
        %770 = vmatmul.f32.gmra.mxu0 %v309
        %v771 = vpop.f32.mrf.mxu0
        %v772 = vadd.f32 %v563, %v771
        %773 = vmatmul.f32.gmra.mxu0 %v311
        %v774 = vpop.f32.mrf.mxu0
        %v775 = vadd.f32 %v566, %v774
        %776 = vmatmul.f32.gmra.mxu0 %v313
        %v777 = vpop.f32.mrf.mxu0
        %v778 = vadd.f32 %v569, %v777
        %779 = vmatmul.f32.gmra.mxu0 %v315
        %v780 = vpop.f32.mrf.mxu0
        %v781 = vadd.f32 %v572, %v780
        %782 = vmatmul.f32.gmra.mxu0 %v317
        %v783 = vpop.f32.mrf.mxu0
        %v784 = vadd.f32 %v575, %v783
        %785 = vmatmul.f32.gmra.mxu0 %v319
        %v786 = vpop.f32.mrf.mxu0
        %v787 = vadd.f32 %v578, %v786
        %788 = vmatmul.f32.gmra.mxu0 %v321
        %v789 = vpop.f32.mrf.mxu0
        %v790 = vadd.f32 %v581, %v789
        %791 = vmatmul.f32.gmra.mxu0 %v323
        %v792 = vpop.f32.mrf.mxu0
        %v793 = vadd.f32 %v584, %v792
        %794 = vmatmul.f32.gmra.mxu0 %v325
        %v795 = vpop.f32.mrf.mxu0
        %v796 = vadd.f32 %v587, %v795
        %797 = vmatmul.f32.gmra.mxu0 %v327
        %v798 = vpop.f32.mrf.mxu0
        %v799 = vadd.f32 %v590, %v798
        %800 = vmatmul.f32.gmra.mxu0 %v329
        %v801 = vpop.f32.mrf.mxu0
        %v802 = vadd.f32 %v593, %v801
        %803 = vmatmul.f32.gmra.mxu0 %v331
        %v804 = vpop.f32.mrf.mxu0
        %v805 = vadd.f32 %v596, %v804
        %806 = vmatmul.f32.gmra.mxu0 %v333
        %v807 = vpop.f32.mrf.mxu0
        %v808 = vadd.f32 %v599, %v807
        %809 = vmatmul.f32.gmra.mxu0 %v335
        %v810 = vpop.f32.mrf.mxu0
        %v811 = vadd.f32 %v602, %v810
        %812 = vmatmul.f32.gmra.mxu0 %v337
        %v813 = vpop.f32.mrf.mxu0
        %v814 = vadd.f32 %v605, %v813
        %815 = vmatmul.f32.gmra.mxu0 %v339
        %v816 = vpop.f32.mrf.mxu0
        %v817 = vadd.f32 %v608, %v816
        %818 = vmatmul.f32.gmra.mxu0 %v341
        %v819 = vpop.f32.mrf.mxu0
        %v820 = vadd.f32 %v611, %v819
        %821 = vmatmul.f32.gmra.mxu0 %v343
        %v822 = vpop.f32.mrf.mxu0
        %v823 = vadd.f32 %v614, %v822
        %824 = vmatmul.f32.gmra.mxu0 %v345
        %v825 = vpop.f32.mrf.mxu0
        %v826 = vadd.f32 %v617, %v825
        %827 = vdwg.mxu0
        %828 = vmatpush.msra.mxu0 %v377
        %829 = vmatpush.msra.mxu0 %v375
        %830 = vmatpush.msra.mxu0 %v373
        %831 = vmatpush.msra.mxu0 %v371
        %832 = vmatpush.msra.mxu0 %v369
        %833 = vmatpush.msra.mxu0 %v367
        %834 = vmatpush.msra.mxu0 %v365
        %835 = vmatpush.msra.mxu0 %v363
        %836 = vmatpush.msra.mxu0 %v361
        %837 = vmatpush.msra.mxu0 %v359
        %838 = vmatpush.msra.mxu0 %v357
        %839 = vmatpush.msra.mxu0 %v355
        %840 = vmatpush.msra.mxu0 %v353
        %841 = vmatpush.msra.mxu0 %v351
        %842 = vmatpush.msra.mxu0 %v349
        %843 = vmatpush.msra.mxu0 %v347
        %844 = vmatmul.f32.gmra.mxu0 %v218
        %v845 = vpop.f32.mrf.mxu0
        %v846 = vadd.f32 0.0, %v845
        %847 = vmatmul.f32.gmra.mxu0 %v220
        %v848 = vpop.f32.mrf.mxu0
        %v849 = vadd.f32 0.0, %v848
        %850 = vmatmul.f32.gmra.mxu0 %v222
        %v851 = vpop.f32.mrf.mxu0
        %v852 = vadd.f32 0.0, %v851
        %853 = vmatmul.f32.gmra.mxu0 %v224
        %v854 = vpop.f32.mrf.mxu0
        %v855 = vadd.f32 0.0, %v854
        %856 = vmatmul.f32.gmra.mxu0 %v226
        %v857 = vpop.f32.mrf.mxu0
        %v858 = vadd.f32 0.0, %v857
        %859 = vmatmul.f32.gmra.mxu0 %v228
        %v860 = vpop.f32.mrf.mxu0
        %v861 = vadd.f32 0.0, %v860
        %862 = vmatmul.f32.gmra.mxu0 %v230
        %v863 = vpop.f32.mrf.mxu0
        %v864 = vadd.f32 0.0, %v863
        %865 = vmatmul.f32.gmra.mxu0 %v232
        %v866 = vpop.f32.mrf.mxu0
        %v867 = vadd.f32 0.0, %v866
        %868 = vmatmul.f32.gmra.mxu0 %v234
        %v869 = vpop.f32.mrf.mxu0
        %v870 = vadd.f32 0.0, %v869
        %871 = vmatmul.f32.gmra.mxu0 %v236
        %v872 = vpop.f32.mrf.mxu0
        %v873 = vadd.f32 0.0, %v872
        %874 = vmatmul.f32.gmra.mxu0 %v238
        %v875 = vpop.f32.mrf.mxu0
        %v876 = vadd.f32 0.0, %v875
        %877 = vmatmul.f32.gmra.mxu0 %v240
        %v878 = vpop.f32.mrf.mxu0
        %v879 = vadd.f32 0.0, %v878
        %880 = vmatmul.f32.gmra.mxu0 %v242
        %v881 = vpop.f32.mrf.mxu0
        %v882 = vadd.f32 0.0, %v881
        %883 = vmatmul.f32.gmra.mxu0 %v244
        %v884 = vpop.f32.mrf.mxu0
        %v885 = vadd.f32 0.0, %v884
        %886 = vmatmul.f32.gmra.mxu0 %v246
        %v887 = vpop.f32.mrf.mxu0
        %v888 = vadd.f32 0.0, %v887
        %889 = vmatmul.f32.gmra.mxu0 %v248
        %v890 = vpop.f32.mrf.mxu0
        %v891 = vadd.f32 0.0, %v890
        %892 = vmatmul.f32.gmra.mxu0 %v250
        %v893 = vpop.f32.mrf.mxu0
        %v894 = vadd.f32 0.0, %v893
        %895 = vmatmul.f32.gmra.mxu0 %v252
        %v896 = vpop.f32.mrf.mxu0
        %v897 = vadd.f32 0.0, %v896
        %898 = vmatmul.f32.gmra.mxu0 %v254
        %v899 = vpop.f32.mrf.mxu0
        %v900 = vadd.f32 0.0, %v899
        %901 = vmatmul.f32.gmra.mxu0 %v256
        %v902 = vpop.f32.mrf.mxu0
        %v903 = vadd.f32 0.0, %v902
        %904 = vmatmul.f32.gmra.mxu0 %v258
        %v905 = vpop.f32.mrf.mxu0
        %v906 = vadd.f32 0.0, %v905
        %907 = vmatmul.f32.gmra.mxu0 %v260
        %v908 = vpop.f32.mrf.mxu0
        %v909 = vadd.f32 0.0, %v908
        %910 = vmatmul.f32.gmra.mxu0 %v262
        %v911 = vpop.f32.mrf.mxu0
        %v912 = vadd.f32 0.0, %v911
        %913 = vmatmul.f32.gmra.mxu0 %v264
        %v914 = vpop.f32.mrf.mxu0
        %v915 = vadd.f32 0.0, %v914
        %916 = vmatmul.f32.gmra.mxu0 %v266
        %v917 = vpop.f32.mrf.mxu0
        %v918 = vadd.f32 0.0, %v917
        %919 = vmatmul.f32.gmra.mxu0 %v268
        %v920 = vpop.f32.mrf.mxu0
        %v921 = vadd.f32 0.0, %v920
        %922 = vmatmul.f32.gmra.mxu0 %v270
        %v923 = vpop.f32.mrf.mxu0
        %v924 = vadd.f32 0.0, %v923
        %925 = vmatmul.f32.gmra.mxu0 %v272
        %v926 = vpop.f32.mrf.mxu0
        %v927 = vadd.f32 0.0, %v926
        %928 = vmatmul.f32.gmra.mxu0 %v274
        %v929 = vpop.f32.mrf.mxu0
        %v930 = vadd.f32 0.0, %v929
        %931 = vmatmul.f32.gmra.mxu0 %v276
        %v932 = vpop.f32.mrf.mxu0
        %v933 = vadd.f32 0.0, %v932
        %934 = vmatmul.f32.gmra.mxu0 %v278
        %v935 = vpop.f32.mrf.mxu0
        %v936 = vadd.f32 0.0, %v935
        %937 = vmatmul.f32.gmra.mxu0 %v280
        %v938 = vpop.f32.mrf.mxu0
        %v939 = vadd.f32 0.0, %v938
        %940 = vmatmul.f32.gmra.mxu0 %v282
        %v941 = vpop.f32.mrf.mxu0
        %v942 = vadd.f32 0.0, %v941
        %943 = vmatmul.f32.gmra.mxu0 %v284
        %v944 = vpop.f32.mrf.mxu0
        %v945 = vadd.f32 0.0, %v944
        %946 = vmatmul.f32.gmra.mxu0 %v286
        %v947 = vpop.f32.mrf.mxu0
        %v948 = vadd.f32 0.0, %v947
        %949 = vmatmul.f32.gmra.mxu0 %v288
        %v950 = vpop.f32.mrf.mxu0
        %v951 = vadd.f32 0.0, %v950
        %952 = vmatmul.f32.gmra.mxu0 %v290
        %v953 = vpop.f32.mrf.mxu0
        %v954 = vadd.f32 0.0, %v953
        %955 = vmatmul.f32.gmra.mxu0 %v292
        %v956 = vpop.f32.mrf.mxu0
        %v957 = vadd.f32 0.0, %v956
        %958 = vmatmul.f32.gmra.mxu0 %v294
        %v959 = vpop.f32.mrf.mxu0
        %v960 = vadd.f32 0.0, %v959
        %961 = vmatmul.f32.gmra.mxu0 %v296
        %v962 = vpop.f32.mrf.mxu0
        %v963 = vadd.f32 0.0, %v962
        %964 = vmatmul.f32.gmra.mxu0 %v298
        %v965 = vpop.f32.mrf.mxu0
        %v966 = vadd.f32 0.0, %v965
        %967 = vmatmul.f32.gmra.mxu0 %v300
        %v968 = vpop.f32.mrf.mxu0
        %v969 = vadd.f32 0.0, %v968
        %970 = vmatmul.f32.gmra.mxu0 %v302
        %v971 = vpop.f32.mrf.mxu0
        %v972 = vadd.f32 0.0, %v971
        %973 = vmatmul.f32.gmra.mxu0 %v304
        %v974 = vpop.f32.mrf.mxu0
        %v975 = vadd.f32 0.0, %v974
        %976 = vmatmul.f32.gmra.mxu0 %v306
        %v977 = vpop.f32.mrf.mxu0
        %v978 = vadd.f32 0.0, %v977
        %979 = vmatmul.f32.gmra.mxu0 %v308
        %v980 = vpop.f32.mrf.mxu0
        %v981 = vadd.f32 0.0, %v980
        %982 = vmatmul.f32.gmra.mxu0 %v310
        %v983 = vpop.f32.mrf.mxu0
        %v984 = vadd.f32 0.0, %v983
        %985 = vmatmul.f32.gmra.mxu0 %v312
        %v986 = vpop.f32.mrf.mxu0
        %v987 = vadd.f32 0.0, %v986
        %988 = vmatmul.f32.gmra.mxu0 %v314
        %v989 = vpop.f32.mrf.mxu0
        %v990 = vadd.f32 0.0, %v989
        %991 = vmatmul.f32.gmra.mxu0 %v316
        %v992 = vpop.f32.mrf.mxu0
        %v993 = vadd.f32 0.0, %v992
        %994 = vmatmul.f32.gmra.mxu0 %v318
        %v995 = vpop.f32.mrf.mxu0
        %v996 = vadd.f32 0.0, %v995
        %997 = vmatmul.f32.gmra.mxu0 %v320
        %v998 = vpop.f32.mrf.mxu0
        %v999 = vadd.f32 0.0, %v998
        %1000 = vmatmul.f32.gmra.mxu0 %v322
        %v1001 = vpop.f32.mrf.mxu0
        %v1002 = vadd.f32 0.0, %v1001
        %1003 = vmatmul.f32.gmra.mxu0 %v324
        %v1004 = vpop.f32.mrf.mxu0
        %v1005 = vadd.f32 0.0, %v1004
        %1006 = vmatmul.f32.gmra.mxu0 %v326
        %v1007 = vpop.f32.mrf.mxu0
        %v1008 = vadd.f32 0.0, %v1007
        %1009 = vmatmul.f32.gmra.mxu0 %v328
        %v1010 = vpop.f32.mrf.mxu0
        %v1011 = vadd.f32 0.0, %v1010
        %1012 = vmatmul.f32.gmra.mxu0 %v330
        %v1013 = vpop.f32.mrf.mxu0
        %v1014 = vadd.f32 0.0, %v1013
        %1015 = vmatmul.f32.gmra.mxu0 %v332
        %v1016 = vpop.f32.mrf.mxu0
        %v1017 = vadd.f32 0.0, %v1016
        %1018 = vmatmul.f32.gmra.mxu0 %v334
        %v1019 = vpop.f32.mrf.mxu0
        %v1020 = vadd.f32 0.0, %v1019
        %1021 = vmatmul.f32.gmra.mxu0 %v336
        %v1022 = vpop.f32.mrf.mxu0
        %v1023 = vadd.f32 0.0, %v1022
        %1024 = vmatmul.f32.gmra.mxu0 %v338
        %v1025 = vpop.f32.mrf.mxu0
        %v1026 = vadd.f32 0.0, %v1025
        %1027 = vmatmul.f32.gmra.mxu0 %v340
        %v1028 = vpop.f32.mrf.mxu0
        %v1029 = vadd.f32 0.0, %v1028
        %1030 = vmatmul.f32.gmra.mxu0 %v342
        %v1031 = vpop.f32.mrf.mxu0
        %v1032 = vadd.f32 0.0, %v1031
        %1033 = vmatmul.f32.gmra.mxu0 %v344
        %v1034 = vpop.f32.mrf.mxu0
        %v1035 = vadd.f32 0.0, %v1034
        %1036 = vdwg.mxu0
        %1037 = vmatpush.msra.mxu0 %v409
        %1038 = vmatpush.msra.mxu0 %v407
        %1039 = vmatpush.msra.mxu0 %v405
        %1040 = vmatpush.msra.mxu0 %v403
        %1041 = vmatpush.msra.mxu0 %v401
        %1042 = vmatpush.msra.mxu0 %v399
        %1043 = vmatpush.msra.mxu0 %v397
        %1044 = vmatpush.msra.mxu0 %v395
        %1045 = vmatpush.msra.mxu0 %v393
        %1046 = vmatpush.msra.mxu0 %v391
        %1047 = vmatpush.msra.mxu0 %v389
        %1048 = vmatpush.msra.mxu0 %v387
        %1049 = vmatpush.msra.mxu0 %v385
        %1050 = vmatpush.msra.mxu0 %v383
        %1051 = vmatpush.msra.mxu0 %v381
        %1052 = vmatpush.msra.mxu0 %v379
        %1053 = vmatmul.f32.gmra.mxu0 %v219
        %v1054 = vpop.f32.mrf.mxu0
        %v1055 = vadd.f32 %v846, %v1054
        %1056 = vmatmul.f32.gmra.mxu0 %v221
        %v1057 = vpop.f32.mrf.mxu0
        %v1058 = vadd.f32 %v849, %v1057
        %1059 = vmatmul.f32.gmra.mxu0 %v223
        %v1060 = vpop.f32.mrf.mxu0
        %v1061 = vadd.f32 %v852, %v1060
        %1062 = vmatmul.f32.gmra.mxu0 %v225
        %v1063 = vpop.f32.mrf.mxu0
        %v1064 = vadd.f32 %v855, %v1063
        %1065 = vmatmul.f32.gmra.mxu0 %v227
        %v1066 = vpop.f32.mrf.mxu0
        %v1067 = vadd.f32 %v858, %v1066
        %1068 = vmatmul.f32.gmra.mxu0 %v229
        %v1069 = vpop.f32.mrf.mxu0
        %v1070 = vadd.f32 %v861, %v1069
        %1071 = vmatmul.f32.gmra.mxu0 %v231
        %v1072 = vpop.f32.mrf.mxu0
        %v1073 = vadd.f32 %v864, %v1072
        %1074 = vmatmul.f32.gmra.mxu0 %v233
        %v1075 = vpop.f32.mrf.mxu0
        %v1076 = vadd.f32 %v867, %v1075
        %1077 = vmatmul.f32.gmra.mxu0 %v235
        %v1078 = vpop.f32.mrf.mxu0
        %v1079 = vadd.f32 %v870, %v1078
        %1080 = vmatmul.f32.gmra.mxu0 %v237
        %v1081 = vpop.f32.mrf.mxu0
        %v1082 = vadd.f32 %v873, %v1081
        %1083 = vmatmul.f32.gmra.mxu0 %v239
        %v1084 = vpop.f32.mrf.mxu0
        %v1085 = vadd.f32 %v876, %v1084
        %1086 = vmatmul.f32.gmra.mxu0 %v241
        %v1087 = vpop.f32.mrf.mxu0
        %v1088 = vadd.f32 %v879, %v1087
        %1089 = vmatmul.f32.gmra.mxu0 %v243
        %v1090 = vpop.f32.mrf.mxu0
        %v1091 = vadd.f32 %v882, %v1090
        %1092 = vmatmul.f32.gmra.mxu0 %v245
        %v1093 = vpop.f32.mrf.mxu0
        %v1094 = vadd.f32 %v885, %v1093
        %1095 = vmatmul.f32.gmra.mxu0 %v247
        %v1096 = vpop.f32.mrf.mxu0
        %v1097 = vadd.f32 %v888, %v1096
        %1098 = vmatmul.f32.gmra.mxu0 %v249
        %v1099 = vpop.f32.mrf.mxu0
        %v1100 = vadd.f32 %v891, %v1099
        %1101 = vmatmul.f32.gmra.mxu0 %v251
        %v1102 = vpop.f32.mrf.mxu0
        %v1103 = vadd.f32 %v894, %v1102
        %1104 = vmatmul.f32.gmra.mxu0 %v253
        %v1105 = vpop.f32.mrf.mxu0
        %v1106 = vadd.f32 %v897, %v1105
        %1107 = vmatmul.f32.gmra.mxu0 %v255
        %v1108 = vpop.f32.mrf.mxu0
        %v1109 = vadd.f32 %v900, %v1108
        %1110 = vmatmul.f32.gmra.mxu0 %v257
        %v1111 = vpop.f32.mrf.mxu0
        %v1112 = vadd.f32 %v903, %v1111
        %1113 = vmatmul.f32.gmra.mxu0 %v259
        %v1114 = vpop.f32.mrf.mxu0
        %v1115 = vadd.f32 %v906, %v1114
        %1116 = vmatmul.f32.gmra.mxu0 %v261
        %v1117 = vpop.f32.mrf.mxu0
        %v1118 = vadd.f32 %v909, %v1117
        %1119 = vmatmul.f32.gmra.mxu0 %v263
        %v1120 = vpop.f32.mrf.mxu0
        %v1121 = vadd.f32 %v912, %v1120
        %1122 = vmatmul.f32.gmra.mxu0 %v265
        %v1123 = vpop.f32.mrf.mxu0
        %v1124 = vadd.f32 %v915, %v1123
        %1125 = vmatmul.f32.gmra.mxu0 %v267
        %v1126 = vpop.f32.mrf.mxu0
        %v1127 = vadd.f32 %v918, %v1126
        %1128 = vmatmul.f32.gmra.mxu0 %v269
        %v1129 = vpop.f32.mrf.mxu0
        %v1130 = vadd.f32 %v921, %v1129
        %1131 = vmatmul.f32.gmra.mxu0 %v271
        %v1132 = vpop.f32.mrf.mxu0
        %v1133 = vadd.f32 %v924, %v1132
        %1134 = vmatmul.f32.gmra.mxu0 %v273
        %v1135 = vpop.f32.mrf.mxu0
        %v1136 = vadd.f32 %v927, %v1135
        %1137 = vmatmul.f32.gmra.mxu0 %v275
        %v1138 = vpop.f32.mrf.mxu0
        %v1139 = vadd.f32 %v930, %v1138
        %1140 = vmatmul.f32.gmra.mxu0 %v277
        %v1141 = vpop.f32.mrf.mxu0
        %v1142 = vadd.f32 %v933, %v1141
        %1143 = vmatmul.f32.gmra.mxu0 %v279
        %v1144 = vpop.f32.mrf.mxu0
        %v1145 = vadd.f32 %v936, %v1144
        %1146 = vmatmul.f32.gmra.mxu0 %v281
        %v1147 = vpop.f32.mrf.mxu0
        %v1148 = vadd.f32 %v939, %v1147
        %1149 = vmatmul.f32.gmra.mxu0 %v283
        %v1150 = vpop.f32.mrf.mxu0
        %v1151 = vadd.f32 %v942, %v1150
        %1152 = vmatmul.f32.gmra.mxu0 %v285
        %v1153 = vpop.f32.mrf.mxu0
        %v1154 = vadd.f32 %v945, %v1153
        %1155 = vmatmul.f32.gmra.mxu0 %v287
        %v1156 = vpop.f32.mrf.mxu0
        %v1157 = vadd.f32 %v948, %v1156
        %1158 = vmatmul.f32.gmra.mxu0 %v289
        %v1159 = vpop.f32.mrf.mxu0
        %v1160 = vadd.f32 %v951, %v1159
        %1161 = vmatmul.f32.gmra.mxu0 %v291
        %v1162 = vpop.f32.mrf.mxu0
        %v1163 = vadd.f32 %v954, %v1162
        %1164 = vmatmul.f32.gmra.mxu0 %v293
        %v1165 = vpop.f32.mrf.mxu0
        %v1166 = vadd.f32 %v957, %v1165
        %1167 = vmatmul.f32.gmra.mxu0 %v295
        %v1168 = vpop.f32.mrf.mxu0
        %v1169 = vadd.f32 %v960, %v1168
        %1170 = vmatmul.f32.gmra.mxu0 %v297
        %v1171 = vpop.f32.mrf.mxu0
        %v1172 = vadd.f32 %v963, %v1171
        %1173 = vmatmul.f32.gmra.mxu0 %v299
        %v1174 = vpop.f32.mrf.mxu0
        %v1175 = vadd.f32 %v966, %v1174
        %1176 = vmatmul.f32.gmra.mxu0 %v301
        %v1177 = vpop.f32.mrf.mxu0
        %v1178 = vadd.f32 %v969, %v1177
        %1179 = vmatmul.f32.gmra.mxu0 %v303
        %v1180 = vpop.f32.mrf.mxu0
        %v1181 = vadd.f32 %v972, %v1180
        %1182 = vmatmul.f32.gmra.mxu0 %v305
        %v1183 = vpop.f32.mrf.mxu0
        %v1184 = vadd.f32 %v975, %v1183
        %1185 = vmatmul.f32.gmra.mxu0 %v307
        %v1186 = vpop.f32.mrf.mxu0
        %v1187 = vadd.f32 %v978, %v1186
        %1188 = vmatmul.f32.gmra.mxu0 %v309
        %v1189 = vpop.f32.mrf.mxu0
        %v1190 = vadd.f32 %v981, %v1189
        %1191 = vmatmul.f32.gmra.mxu0 %v311
        %v1192 = vpop.f32.mrf.mxu0
        %v1193 = vadd.f32 %v984, %v1192
        %1194 = vmatmul.f32.gmra.mxu0 %v313
        %v1195 = vpop.f32.mrf.mxu0
        %v1196 = vadd.f32 %v987, %v1195
        %1197 = vmatmul.f32.gmra.mxu0 %v315
        %v1198 = vpop.f32.mrf.mxu0
        %v1199 = vadd.f32 %v990, %v1198
        %1200 = vmatmul.f32.gmra.mxu0 %v317
        %v1201 = vpop.f32.mrf.mxu0
        %v1202 = vadd.f32 %v993, %v1201
        %1203 = vmatmul.f32.gmra.mxu0 %v319
        %v1204 = vpop.f32.mrf.mxu0
        %v1205 = vadd.f32 %v996, %v1204
        %1206 = vmatmul.f32.gmra.mxu0 %v321
        %v1207 = vpop.f32.mrf.mxu0
        %v1208 = vadd.f32 %v999, %v1207
        %1209 = vmatmul.f32.gmra.mxu0 %v323
        %v1210 = vpop.f32.mrf.mxu0
        %v1211 = vadd.f32 %v1002, %v1210
        %1212 = vmatmul.f32.gmra.mxu0 %v325
        %v1213 = vpop.f32.mrf.mxu0
        %v1214 = vadd.f32 %v1005, %v1213
        %1215 = vmatmul.f32.gmra.mxu0 %v327
        %v1216 = vpop.f32.mrf.mxu0
        %v1217 = vadd.f32 %v1008, %v1216
        %1218 = vmatmul.f32.gmra.mxu0 %v329
        %v1219 = vpop.f32.mrf.mxu0
        %v1220 = vadd.f32 %v1011, %v1219
        %1221 = vmatmul.f32.gmra.mxu0 %v331
        %v1222 = vpop.f32.mrf.mxu0
        %v1223 = vadd.f32 %v1014, %v1222
        %1224 = vmatmul.f32.gmra.mxu0 %v333
        %v1225 = vpop.f32.mrf.mxu0
        %v1226 = vadd.f32 %v1017, %v1225
        %1227 = vmatmul.f32.gmra.mxu0 %v335
        %v1228 = vpop.f32.mrf.mxu0
        %v1229 = vadd.f32 %v1020, %v1228
        %1230 = vmatmul.f32.gmra.mxu0 %v337
        %v1231 = vpop.f32.mrf.mxu0
        %v1232 = vadd.f32 %v1023, %v1231
        %1233 = vmatmul.f32.gmra.mxu0 %v339
        %v1234 = vpop.f32.mrf.mxu0
        %v1235 = vadd.f32 %v1026, %v1234
        %1236 = vmatmul.f32.gmra.mxu0 %v341
        %v1237 = vpop.f32.mrf.mxu0
        %v1238 = vadd.f32 %v1029, %v1237
        %1239 = vmatmul.f32.gmra.mxu0 %v343
        %v1240 = vpop.f32.mrf.mxu0
        %v1241 = vadd.f32 %v1032, %v1240
        %1242 = vmatmul.f32.gmra.mxu0 %v345
        %v1243 = vpop.f32.mrf.mxu0
        %v1244 = vadd.f32 %v1035, %v1243
        %1245 = vdwg.mxu0
        %v1246 = vmax.f32 %v637, %v1055
        %1247 = vmax.xlane.f32.xlu0 %v1246
        %v1248 = vpop.xlane.xlu0 %1247
        %v1249 = vmax.f32 %v640, %v1058
        %1250 = vmax.xlane.f32.xlu0 %v1249
        %v1251 = vpop.xlane.xlu0 %1250
        %v1252 = vmax.f32 %v643, %v1061
        %1253 = vmax.xlane.f32.xlu0 %v1252
        %v1254 = vpop.xlane.xlu0 %1253
        %v1255 = vmax.f32 %v646, %v1064
        %1256 = vmax.xlane.f32.xlu0 %v1255
        %v1257 = vpop.xlane.xlu0 %1256
        %v1258 = vmax.f32 %v649, %v1067
        %1259 = vmax.xlane.f32.xlu0 %v1258
        %v1260 = vpop.xlane.xlu0 %1259
        %v1261 = vmax.f32 %v652, %v1070
        %1262 = vmax.xlane.f32.xlu0 %v1261
        %v1263 = vpop.xlane.xlu0 %1262
        %v1264 = vmax.f32 %v655, %v1073
        %1265 = vmax.xlane.f32.xlu0 %v1264
        %v1266 = vpop.xlane.xlu0 %1265
        %v1267 = vmax.f32 %v658, %v1076
        %1268 = vmax.xlane.f32.xlu0 %v1267
        %v1269 = vpop.xlane.xlu0 %1268
        %v1270 = vmax.f32 %v661, %v1079
        %1271 = vmax.xlane.f32.xlu0 %v1270
        %v1272 = vpop.xlane.xlu0 %1271
        %v1273 = vmax.f32 %v664, %v1082
        %1274 = vmax.xlane.f32.xlu0 %v1273
        %v1275 = vpop.xlane.xlu0 %1274
        %v1276 = vmax.f32 %v667, %v1085
        %1277 = vmax.xlane.f32.xlu0 %v1276
        %v1278 = vpop.xlane.xlu0 %1277
        %v1279 = vmax.f32 %v670, %v1088
        %1280 = vmax.xlane.f32.xlu0 %v1279
        %v1281 = vpop.xlane.xlu0 %1280
        %v1282 = vmax.f32 %v673, %v1091
        %1283 = vmax.xlane.f32.xlu0 %v1282
        %v1284 = vpop.xlane.xlu0 %1283
        %v1285 = vmax.f32 %v676, %v1094
        %1286 = vmax.xlane.f32.xlu0 %v1285
        %v1287 = vpop.xlane.xlu0 %1286
        %v1288 = vmax.f32 %v679, %v1097
        %1289 = vmax.xlane.f32.xlu0 %v1288
        %v1290 = vpop.xlane.xlu0 %1289
        %v1291 = vmax.f32 %v682, %v1100
        %1292 = vmax.xlane.f32.xlu0 %v1291
        %v1293 = vpop.xlane.xlu0 %1292
        %v1294 = vmax.f32 %v685, %v1103
        %1295 = vmax.xlane.f32.xlu0 %v1294
        %v1296 = vpop.xlane.xlu0 %1295
        %v1297 = vmax.f32 %v688, %v1106
        %1298 = vmax.xlane.f32.xlu0 %v1297
        %v1299 = vpop.xlane.xlu0 %1298
        %v1300 = vmax.f32 %v691, %v1109
        %1301 = vmax.xlane.f32.xlu0 %v1300
        %v1302 = vpop.xlane.xlu0 %1301
        %v1303 = vmax.f32 %v694, %v1112
        %1304 = vmax.xlane.f32.xlu0 %v1303
        %v1305 = vpop.xlane.xlu0 %1304
        %v1306 = vmax.f32 %v697, %v1115
        %1307 = vmax.xlane.f32.xlu0 %v1306
        %v1308 = vpop.xlane.xlu0 %1307
        %v1309 = vmax.f32 %v700, %v1118
        %1310 = vmax.xlane.f32.xlu0 %v1309
        %v1311 = vpop.xlane.xlu0 %1310
        %v1312 = vmax.f32 %v703, %v1121
        %1313 = vmax.xlane.f32.xlu0 %v1312
        %v1314 = vpop.xlane.xlu0 %1313
        %v1315 = vmax.f32 %v706, %v1124
        %1316 = vmax.xlane.f32.xlu0 %v1315
        %v1317 = vpop.xlane.xlu0 %1316
        %v1318 = vmax.f32 %v709, %v1127
        %1319 = vmax.xlane.f32.xlu0 %v1318
        %v1320 = vpop.xlane.xlu0 %1319
        %v1321 = vmax.f32 %v712, %v1130
        %1322 = vmax.xlane.f32.xlu0 %v1321
        %v1323 = vpop.xlane.xlu0 %1322
        %v1324 = vmax.f32 %v715, %v1133
        %1325 = vmax.xlane.f32.xlu0 %v1324
        %v1326 = vpop.xlane.xlu0 %1325
        %v1327 = vmax.f32 %v718, %v1136
        %1328 = vmax.xlane.f32.xlu0 %v1327
        %v1329 = vpop.xlane.xlu0 %1328
        %v1330 = vmax.f32 %v721, %v1139
        %1331 = vmax.xlane.f32.xlu0 %v1330
        %v1332 = vpop.xlane.xlu0 %1331
        %v1333 = vmax.f32 %v724, %v1142
        %1334 = vmax.xlane.f32.xlu0 %v1333
        %v1335 = vpop.xlane.xlu0 %1334
        %v1336 = vmax.f32 %v727, %v1145
        %1337 = vmax.xlane.f32.xlu0 %v1336
        %v1338 = vpop.xlane.xlu0 %1337
        %v1339 = vmax.f32 %v730, %v1148
        %1340 = vmax.xlane.f32.xlu0 %v1339
        %v1341 = vpop.xlane.xlu0 %1340
        %v1342 = vmax.f32 %v733, %v1151
        %1343 = vmax.xlane.f32.xlu0 %v1342
        %v1344 = vpop.xlane.xlu0 %1343
        %v1345 = vmax.f32 %v736, %v1154
        %1346 = vmax.xlane.f32.xlu0 %v1345
        %v1347 = vpop.xlane.xlu0 %1346
        %v1348 = vmax.f32 %v739, %v1157
        %1349 = vmax.xlane.f32.xlu0 %v1348
        %v1350 = vpop.xlane.xlu0 %1349
        %v1351 = vmax.f32 %v742, %v1160
        %1352 = vmax.xlane.f32.xlu0 %v1351
        %v1353 = vpop.xlane.xlu0 %1352
        %v1354 = vmax.f32 %v745, %v1163
        %1355 = vmax.xlane.f32.xlu0 %v1354
        %v1356 = vpop.xlane.xlu0 %1355
        %v1357 = vmax.f32 %v748, %v1166
        %1358 = vmax.xlane.f32.xlu0 %v1357
        %v1359 = vpop.xlane.xlu0 %1358
        %v1360 = vmax.f32 %v751, %v1169
        %1361 = vmax.xlane.f32.xlu0 %v1360
        %v1362 = vpop.xlane.xlu0 %1361
        %v1363 = vmax.f32 %v754, %v1172
        %1364 = vmax.xlane.f32.xlu0 %v1363
        %v1365 = vpop.xlane.xlu0 %1364
        %v1366 = vmax.f32 %v757, %v1175
        %1367 = vmax.xlane.f32.xlu0 %v1366
        %v1368 = vpop.xlane.xlu0 %1367
        %v1369 = vmax.f32 %v760, %v1178
        %1370 = vmax.xlane.f32.xlu0 %v1369
        %v1371 = vpop.xlane.xlu0 %1370
        %v1372 = vmax.f32 %v763, %v1181
        %1373 = vmax.xlane.f32.xlu0 %v1372
        %v1374 = vpop.xlane.xlu0 %1373
        %v1375 = vmax.f32 %v766, %v1184
        %1376 = vmax.xlane.f32.xlu0 %v1375
        %v1377 = vpop.xlane.xlu0 %1376
        %v1378 = vmax.f32 %v769, %v1187
        %1379 = vmax.xlane.f32.xlu0 %v1378
        %v1380 = vpop.xlane.xlu0 %1379
        %v1381 = vmax.f32 %v772, %v1190
        %1382 = vmax.xlane.f32.xlu0 %v1381
        %v1383 = vpop.xlane.xlu0 %1382
        %v1384 = vmax.f32 %v775, %v1193
        %1385 = vmax.xlane.f32.xlu0 %v1384
        %v1386 = vpop.xlane.xlu0 %1385
        %v1387 = vmax.f32 %v778, %v1196
        %1388 = vmax.xlane.f32.xlu0 %v1387
        %v1389 = vpop.xlane.xlu0 %1388
        %v1390 = vmax.f32 %v781, %v1199
        %1391 = vmax.xlane.f32.xlu0 %v1390
        %v1392 = vpop.xlane.xlu0 %1391
        %v1393 = vmax.f32 %v784, %v1202
        %1394 = vmax.xlane.f32.xlu0 %v1393
        %v1395 = vpop.xlane.xlu0 %1394
        %v1396 = vmax.f32 %v787, %v1205
        %1397 = vmax.xlane.f32.xlu0 %v1396
        %v1398 = vpop.xlane.xlu0 %1397
        %v1399 = vmax.f32 %v790, %v1208
        %1400 = vmax.xlane.f32.xlu0 %v1399
        %v1401 = vpop.xlane.xlu0 %1400
        %v1402 = vmax.f32 %v793, %v1211
        %1403 = vmax.xlane.f32.xlu0 %v1402
        %v1404 = vpop.xlane.xlu0 %1403
        %v1405 = vmax.f32 %v796, %v1214
        %1406 = vmax.xlane.f32.xlu0 %v1405
        %v1407 = vpop.xlane.xlu0 %1406
        %v1408 = vmax.f32 %v799, %v1217
        %1409 = vmax.xlane.f32.xlu0 %v1408
        %v1410 = vpop.xlane.xlu0 %1409
        %v1411 = vmax.f32 %v802, %v1220
        %1412 = vmax.xlane.f32.xlu0 %v1411
        %v1413 = vpop.xlane.xlu0 %1412
        %v1414 = vmax.f32 %v805, %v1223
        %1415 = vmax.xlane.f32.xlu0 %v1414
        %v1416 = vpop.xlane.xlu0 %1415
        %v1417 = vmax.f32 %v808, %v1226
        %1418 = vmax.xlane.f32.xlu0 %v1417
        %v1419 = vpop.xlane.xlu0 %1418
        %v1420 = vmax.f32 %v811, %v1229
        %1421 = vmax.xlane.f32.xlu0 %v1420
        %v1422 = vpop.xlane.xlu0 %1421
        %v1423 = vmax.f32 %v814, %v1232
        %1424 = vmax.xlane.f32.xlu0 %v1423
        %v1425 = vpop.xlane.xlu0 %1424
        %v1426 = vmax.f32 %v817, %v1235
        %1427 = vmax.xlane.f32.xlu0 %v1426
        %v1428 = vpop.xlane.xlu0 %1427
        %v1429 = vmax.f32 %v820, %v1238
        %1430 = vmax.xlane.f32.xlu0 %v1429
        %v1431 = vpop.xlane.xlu0 %1430
        %v1432 = vmax.f32 %v823, %v1241
        %1433 = vmax.xlane.f32.xlu0 %v1432
        %v1434 = vpop.xlane.xlu0 %1433
        %v1435 = vmax.f32 %v826, %v1244
        %1436 = vmax.xlane.f32.xlu0 %v1435
        %v1437 = vpop.xlane.xlu0 %1436
        %v1438 = vsub.f32 %v637, %v1248
        %v1439 = vsub.f32 %v1055, %v1248
        %v1440 = vsub.f32 %v640, %v1251
        %v1441 = vsub.f32 %v1058, %v1251
        %v1442 = vsub.f32 %v643, %v1254
        %v1443 = vsub.f32 %v1061, %v1254
        %v1444 = vsub.f32 %v646, %v1257
        %v1445 = vsub.f32 %v1064, %v1257
        %v1446 = vsub.f32 %v649, %v1260
        %v1447 = vsub.f32 %v1067, %v1260
        %v1448 = vsub.f32 %v652, %v1263
        %v1449 = vsub.f32 %v1070, %v1263
        %v1450 = vsub.f32 %v655, %v1266
        %v1451 = vsub.f32 %v1073, %v1266
        %v1452 = vsub.f32 %v658, %v1269
        %v1453 = vsub.f32 %v1076, %v1269
        %v1454 = vsub.f32 %v661, %v1272
        %v1455 = vsub.f32 %v1079, %v1272
        %v1456 = vsub.f32 %v664, %v1275
        %v1457 = vsub.f32 %v1082, %v1275
        %v1458 = vsub.f32 %v667, %v1278
        %v1459 = vsub.f32 %v1085, %v1278
        %v1460 = vsub.f32 %v670, %v1281
        %v1461 = vsub.f32 %v1088, %v1281
        %v1462 = vsub.f32 %v673, %v1284
        %v1463 = vsub.f32 %v1091, %v1284
        %v1464 = vsub.f32 %v676, %v1287
        %v1465 = vsub.f32 %v1094, %v1287
        %v1466 = vsub.f32 %v679, %v1290
        %v1467 = vsub.f32 %v1097, %v1290
        %v1468 = vsub.f32 %v682, %v1293
        %v1469 = vsub.f32 %v1100, %v1293
        %v1470 = vsub.f32 %v685, %v1296
        %v1471 = vsub.f32 %v1103, %v1296
        %v1472 = vsub.f32 %v688, %v1299
        %v1473 = vsub.f32 %v1106, %v1299
        %v1474 = vsub.f32 %v691, %v1302
        %v1475 = vsub.f32 %v1109, %v1302
        %v1476 = vsub.f32 %v694, %v1305
        %v1477 = vsub.f32 %v1112, %v1305
        %v1478 = vsub.f32 %v697, %v1308
        %v1479 = vsub.f32 %v1115, %v1308
        %v1480 = vsub.f32 %v700, %v1311
        %v1481 = vsub.f32 %v1118, %v1311
        %v1482 = vsub.f32 %v703, %v1314
        %v1483 = vsub.f32 %v1121, %v1314
        %v1484 = vsub.f32 %v706, %v1317
        %v1485 = vsub.f32 %v1124, %v1317
        %v1486 = vsub.f32 %v709, %v1320
        %v1487 = vsub.f32 %v1127, %v1320
        %v1488 = vsub.f32 %v712, %v1323
        %v1489 = vsub.f32 %v1130, %v1323
        %v1490 = vsub.f32 %v715, %v1326
        %v1491 = vsub.f32 %v1133, %v1326
        %v1492 = vsub.f32 %v718, %v1329
        %v1493 = vsub.f32 %v1136, %v1329
        %v1494 = vsub.f32 %v721, %v1332
        %v1495 = vsub.f32 %v1139, %v1332
        %v1496 = vsub.f32 %v724, %v1335
        %v1497 = vsub.f32 %v1142, %v1335
        %v1498 = vsub.f32 %v727, %v1338
        %v1499 = vsub.f32 %v1145, %v1338
        %v1500 = vsub.f32 %v730, %v1341
        %v1501 = vsub.f32 %v1148, %v1341
        %v1502 = vsub.f32 %v733, %v1344
        %v1503 = vsub.f32 %v1151, %v1344
        %v1504 = vsub.f32 %v736, %v1347
        %v1505 = vsub.f32 %v1154, %v1347
        %v1506 = vsub.f32 %v739, %v1350
        %v1507 = vsub.f32 %v1157, %v1350
        %v1508 = vsub.f32 %v742, %v1353
        %v1509 = vsub.f32 %v1160, %v1353
        %v1510 = vsub.f32 %v745, %v1356
        %v1511 = vsub.f32 %v1163, %v1356
        %v1512 = vsub.f32 %v748, %v1359
        %v1513 = vsub.f32 %v1166, %v1359
        %v1514 = vsub.f32 %v751, %v1362
        %v1515 = vsub.f32 %v1169, %v1362
        %v1516 = vsub.f32 %v754, %v1365
        %v1517 = vsub.f32 %v1172, %v1365
        %v1518 = vsub.f32 %v757, %v1368
        %v1519 = vsub.f32 %v1175, %v1368
        %v1520 = vsub.f32 %v760, %v1371
        %v1521 = vsub.f32 %v1178, %v1371
        %v1522 = vsub.f32 %v763, %v1374
        %v1523 = vsub.f32 %v1181, %v1374
        %v1524 = vsub.f32 %v766, %v1377
        %v1525 = vsub.f32 %v1184, %v1377
        %v1526 = vsub.f32 %v769, %v1380
        %v1527 = vsub.f32 %v1187, %v1380
        %v1528 = vsub.f32 %v772, %v1383
        %v1529 = vsub.f32 %v1190, %v1383
        %v1530 = vsub.f32 %v775, %v1386
        %v1531 = vsub.f32 %v1193, %v1386
        %v1532 = vsub.f32 %v778, %v1389
        %v1533 = vsub.f32 %v1196, %v1389
        %v1534 = vsub.f32 %v781, %v1392
        %v1535 = vsub.f32 %v1199, %v1392
        %v1536 = vsub.f32 %v784, %v1395
        %v1537 = vsub.f32 %v1202, %v1395
        %v1538 = vsub.f32 %v787, %v1398
        %v1539 = vsub.f32 %v1205, %v1398
        %v1540 = vsub.f32 %v790, %v1401
        %v1541 = vsub.f32 %v1208, %v1401
        %v1542 = vsub.f32 %v793, %v1404
        %v1543 = vsub.f32 %v1211, %v1404
        %v1544 = vsub.f32 %v796, %v1407
        %v1545 = vsub.f32 %v1214, %v1407
        %v1546 = vsub.f32 %v799, %v1410
        %v1547 = vsub.f32 %v1217, %v1410
        %v1548 = vsub.f32 %v802, %v1413
        %v1549 = vsub.f32 %v1220, %v1413
        %v1550 = vsub.f32 %v805, %v1416
        %v1551 = vsub.f32 %v1223, %v1416
        %v1552 = vsub.f32 %v808, %v1419
        %v1553 = vsub.f32 %v1226, %v1419
        %v1554 = vsub.f32 %v811, %v1422
        %v1555 = vsub.f32 %v1229, %v1422
        %v1556 = vsub.f32 %v814, %v1425
        %v1557 = vsub.f32 %v1232, %v1425
        %v1558 = vsub.f32 %v817, %v1428
        %v1559 = vsub.f32 %v1235, %v1428
        %v1560 = vsub.f32 %v820, %v1431
        %v1561 = vsub.f32 %v1238, %v1431
        %v1562 = vsub.f32 %v823, %v1434
        %v1563 = vsub.f32 %v1241, %v1434
        %v1564 = vsub.f32 %v826, %v1437
        %v1565 = vsub.f32 %v1244, %v1437
        %v1566 = vmul.f32 %v1438, 1.442695
        %v1567 = vpow.pop %v1566
        %v1568 = vmul.f32 %v1439, 1.442695
        %v1569 = vpow.pop %v1568
        %v1570 = vmul.f32 %v1440, 1.442695
        %v1571 = vpow.pop %v1570
        %v1572 = vmul.f32 %v1441, 1.442695
        %v1573 = vpow.pop %v1572
        %v1574 = vmul.f32 %v1442, 1.442695
        %v1575 = vpow.pop %v1574
        %v1576 = vmul.f32 %v1443, 1.442695
        %v1577 = vpow.pop %v1576
        %v1578 = vmul.f32 %v1444, 1.442695
        %v1579 = vpow.pop %v1578
        %v1580 = vmul.f32 %v1445, 1.442695
        %v1581 = vpow.pop %v1580
        %v1582 = vmul.f32 %v1446, 1.442695
        %v1583 = vpow.pop %v1582
        %v1584 = vmul.f32 %v1447, 1.442695
        %v1585 = vpow.pop %v1584
        %v1586 = vmul.f32 %v1448, 1.442695
        %v1587 = vpow.pop %v1586
        %v1588 = vmul.f32 %v1449, 1.442695
        %v1589 = vpow.pop %v1588
        %v1590 = vmul.f32 %v1450, 1.442695
        %v1591 = vpow.pop %v1590
        %v1592 = vmul.f32 %v1451, 1.442695
        %v1593 = vpow.pop %v1592
        %v1594 = vmul.f32 %v1452, 1.442695
        %v1595 = vpow.pop %v1594
        %v1596 = vmul.f32 %v1453, 1.442695
        %v1597 = vpow.pop %v1596
        %v1598 = vmul.f32 %v1454, 1.442695
        %v1599 = vpow.pop %v1598
        %v1600 = vmul.f32 %v1455, 1.442695
        %v1601 = vpow.pop %v1600
        %v1602 = vmul.f32 %v1456, 1.442695
        %v1603 = vpow.pop %v1602
        %v1604 = vmul.f32 %v1457, 1.442695
        %v1605 = vpow.pop %v1604
        %v1606 = vmul.f32 %v1458, 1.442695
        %v1607 = vpow.pop %v1606
        %v1608 = vmul.f32 %v1459, 1.442695
        %v1609 = vpow.pop %v1608
        %v1610 = vmul.f32 %v1460, 1.442695
        %v1611 = vpow.pop %v1610
        %v1612 = vmul.f32 %v1461, 1.442695
        %v1613 = vpow.pop %v1612
        %v1614 = vmul.f32 %v1462, 1.442695
        %v1615 = vpow.pop %v1614
        %v1616 = vmul.f32 %v1463, 1.442695
        %v1617 = vpow.pop %v1616
        %v1618 = vmul.f32 %v1464, 1.442695
        %v1619 = vpow.pop %v1618
        %v1620 = vmul.f32 %v1465, 1.442695
        %v1621 = vpow.pop %v1620
        %v1622 = vmul.f32 %v1466, 1.442695
        %v1623 = vpow.pop %v1622
        %v1624 = vmul.f32 %v1467, 1.442695
        %v1625 = vpow.pop %v1624
        %v1626 = vmul.f32 %v1468, 1.442695
        %v1627 = vpow.pop %v1626
        %v1628 = vmul.f32 %v1469, 1.442695
        %v1629 = vpow.pop %v1628
        %v1630 = vmul.f32 %v1470, 1.442695
        %v1631 = vpow.pop %v1630
        %v1632 = vmul.f32 %v1471, 1.442695
        %v1633 = vpow.pop %v1632
        %v1634 = vmul.f32 %v1472, 1.442695
        %v1635 = vpow.pop %v1634
        %v1636 = vmul.f32 %v1473, 1.442695
        %v1637 = vpow.pop %v1636
        %v1638 = vmul.f32 %v1474, 1.442695
        %v1639 = vpow.pop %v1638
        %v1640 = vmul.f32 %v1475, 1.442695
        %v1641 = vpow.pop %v1640
        %v1642 = vmul.f32 %v1476, 1.442695
        %v1643 = vpow.pop %v1642
        %v1644 = vmul.f32 %v1477, 1.442695
        %v1645 = vpow.pop %v1644
        %v1646 = vmul.f32 %v1478, 1.442695
        %v1647 = vpow.pop %v1646
        %v1648 = vmul.f32 %v1479, 1.442695
        %v1649 = vpow.pop %v1648
        %v1650 = vmul.f32 %v1480, 1.442695
        %v1651 = vpow.pop %v1650
        %v1652 = vmul.f32 %v1481, 1.442695
        %v1653 = vpow.pop %v1652
        %v1654 = vmul.f32 %v1482, 1.442695
        %v1655 = vpow.pop %v1654
        %v1656 = vmul.f32 %v1483, 1.442695
        %v1657 = vpow.pop %v1656
        %v1658 = vmul.f32 %v1484, 1.442695
        %v1659 = vpow.pop %v1658
        %v1660 = vmul.f32 %v1485, 1.442695
        %v1661 = vpow.pop %v1660
        %v1662 = vmul.f32 %v1486, 1.442695
        %v1663 = vpow.pop %v1662
        %v1664 = vmul.f32 %v1487, 1.442695
        %v1665 = vpow.pop %v1664
        %v1666 = vmul.f32 %v1488, 1.442695
        %v1667 = vpow.pop %v1666
        %v1668 = vmul.f32 %v1489, 1.442695
        %v1669 = vpow.pop %v1668
        %v1670 = vmul.f32 %v1490, 1.442695
        %v1671 = vpow.pop %v1670
        %v1672 = vmul.f32 %v1491, 1.442695
        %v1673 = vpow.pop %v1672
        %v1674 = vmul.f32 %v1492, 1.442695
        %v1675 = vpow.pop %v1674
        %v1676 = vmul.f32 %v1493, 1.442695
        %v1677 = vpow.pop %v1676
        %v1678 = vmul.f32 %v1494, 1.442695
        %v1679 = vpow.pop %v1678
        %v1680 = vmul.f32 %v1495, 1.442695
        %v1681 = vpow.pop %v1680
        %v1682 = vmul.f32 %v1496, 1.442695
        %v1683 = vpow.pop %v1682
        %v1684 = vmul.f32 %v1497, 1.442695
        %v1685 = vpow.pop %v1684
        %v1686 = vmul.f32 %v1498, 1.442695
        %v1687 = vpow.pop %v1686
        %v1688 = vmul.f32 %v1499, 1.442695
        %v1689 = vpow.pop %v1688
        %v1690 = vmul.f32 %v1500, 1.442695
        %v1691 = vpow.pop %v1690
        %v1692 = vmul.f32 %v1501, 1.442695
        %v1693 = vpow.pop %v1692
        %v1694 = vmul.f32 %v1502, 1.442695
        %v1695 = vpow.pop %v1694
        %v1696 = vmul.f32 %v1503, 1.442695
        %v1697 = vpow.pop %v1696
        %v1698 = vmul.f32 %v1504, 1.442695
        %v1699 = vpow.pop %v1698
        %v1700 = vmul.f32 %v1505, 1.442695
        %v1701 = vpow.pop %v1700
        %v1702 = vmul.f32 %v1506, 1.442695
        %v1703 = vpow.pop %v1702
        %v1704 = vmul.f32 %v1507, 1.442695
        %v1705 = vpow.pop %v1704
        %v1706 = vmul.f32 %v1508, 1.442695
        %v1707 = vpow.pop %v1706
        %v1708 = vmul.f32 %v1509, 1.442695
        %v1709 = vpow.pop %v1708
        %v1710 = vmul.f32 %v1510, 1.442695
        %v1711 = vpow.pop %v1710
        %v1712 = vmul.f32 %v1511, 1.442695
        %v1713 = vpow.pop %v1712
        %v1714 = vmul.f32 %v1512, 1.442695
        %v1715 = vpow.pop %v1714
        %v1716 = vmul.f32 %v1513, 1.442695
        %v1717 = vpow.pop %v1716
        %v1718 = vmul.f32 %v1514, 1.442695
        %v1719 = vpow.pop %v1718
        %v1720 = vmul.f32 %v1515, 1.442695
        %v1721 = vpow.pop %v1720
        %v1722 = vmul.f32 %v1516, 1.442695
        %v1723 = vpow.pop %v1722
        %v1724 = vmul.f32 %v1517, 1.442695
        %v1725 = vpow.pop %v1724
        %v1726 = vmul.f32 %v1518, 1.442695
        %v1727 = vpow.pop %v1726
        %v1728 = vmul.f32 %v1519, 1.442695
        %v1729 = vpow.pop %v1728
        %v1730 = vmul.f32 %v1520, 1.442695
        %v1731 = vpow.pop %v1730
        %v1732 = vmul.f32 %v1521, 1.442695
        %v1733 = vpow.pop %v1732
        %v1734 = vmul.f32 %v1522, 1.442695
        %v1735 = vpow.pop %v1734
        %v1736 = vmul.f32 %v1523, 1.442695
        %v1737 = vpow.pop %v1736
        %v1738 = vmul.f32 %v1524, 1.442695
        %v1739 = vpow.pop %v1738
        %v1740 = vmul.f32 %v1525, 1.442695
        %v1741 = vpow.pop %v1740
        %v1742 = vmul.f32 %v1526, 1.442695
        %v1743 = vpow.pop %v1742
        %v1744 = vmul.f32 %v1527, 1.442695
        %v1745 = vpow.pop %v1744
        %v1746 = vmul.f32 %v1528, 1.442695
        %v1747 = vpow.pop %v1746
        %v1748 = vmul.f32 %v1529, 1.442695
        %v1749 = vpow.pop %v1748
        %v1750 = vmul.f32 %v1530, 1.442695
        %v1751 = vpow.pop %v1750
        %v1752 = vmul.f32 %v1531, 1.442695
        %v1753 = vpow.pop %v1752
        %v1754 = vmul.f32 %v1532, 1.442695
        %v1755 = vpow.pop %v1754
        %v1756 = vmul.f32 %v1533, 1.442695
        %v1757 = vpow.pop %v1756
        %v1758 = vmul.f32 %v1534, 1.442695
        %v1759 = vpow.pop %v1758
        %v1760 = vmul.f32 %v1535, 1.442695
        %v1761 = vpow.pop %v1760
        %v1762 = vmul.f32 %v1536, 1.442695
        %v1763 = vpow.pop %v1762
        %v1764 = vmul.f32 %v1537, 1.442695
        %v1765 = vpow.pop %v1764
        %v1766 = vmul.f32 %v1538, 1.442695
        %v1767 = vpow.pop %v1766
        %v1768 = vmul.f32 %v1539, 1.442695
        %v1769 = vpow.pop %v1768
        %v1770 = vmul.f32 %v1540, 1.442695
        %v1771 = vpow.pop %v1770
        %v1772 = vmul.f32 %v1541, 1.442695
        %v1773 = vpow.pop %v1772
        %v1774 = vmul.f32 %v1542, 1.442695
        %v1775 = vpow.pop %v1774
        %v1776 = vmul.f32 %v1543, 1.442695
        %v1777 = vpow.pop %v1776
        %v1778 = vmul.f32 %v1544, 1.442695
        %v1779 = vpow.pop %v1778
        %v1780 = vmul.f32 %v1545, 1.442695
        %v1781 = vpow.pop %v1780
        %v1782 = vmul.f32 %v1546, 1.442695
        %v1783 = vpow.pop %v1782
        %v1784 = vmul.f32 %v1547, 1.442695
        %v1785 = vpow.pop %v1784
        %v1786 = vmul.f32 %v1548, 1.442695
        %v1787 = vpow.pop %v1786
        %v1788 = vmul.f32 %v1549, 1.442695
        %v1789 = vpow.pop %v1788
        %v1790 = vmul.f32 %v1550, 1.442695
        %v1791 = vpow.pop %v1790
        %v1792 = vmul.f32 %v1551, 1.442695
        %v1793 = vpow.pop %v1792
        %v1794 = vmul.f32 %v1552, 1.442695
        %v1795 = vpow.pop %v1794
        %v1796 = vmul.f32 %v1553, 1.442695
        %v1797 = vpow.pop %v1796
        %v1798 = vmul.f32 %v1554, 1.442695
        %v1799 = vpow.pop %v1798
        %v1800 = vmul.f32 %v1555, 1.442695
        %v1801 = vpow.pop %v1800
        %v1802 = vmul.f32 %v1556, 1.442695
        %v1803 = vpow.pop %v1802
        %v1804 = vmul.f32 %v1557, 1.442695
        %v1805 = vpow.pop %v1804
        %v1806 = vmul.f32 %v1558, 1.442695
        %v1807 = vpow.pop %v1806
        %v1808 = vmul.f32 %v1559, 1.442695
        %v1809 = vpow.pop %v1808
        %v1810 = vmul.f32 %v1560, 1.442695
        %v1811 = vpow.pop %v1810
        %v1812 = vmul.f32 %v1561, 1.442695
        %v1813 = vpow.pop %v1812
        %v1814 = vmul.f32 %v1562, 1.442695
        %v1815 = vpow.pop %v1814
        %v1816 = vmul.f32 %v1563, 1.442695
        %v1817 = vpow.pop %v1816
        %v1818 = vmul.f32 %v1564, 1.442695
        %v1819 = vpow.pop %v1818
        %v1820 = vmul.f32 %v1565, 1.442695
        %v1821 = vpow.pop %v1820
        %v1822 = vadd.f32 %v1567, %v1569
        %1823 = vadd.xlane.f32.xlu0 %v1822
        %v1824 = vpop.xlane.xlu0 %1823
        %v1825 = vadd.f32 %v1571, %v1573
        %1826 = vadd.xlane.f32.xlu0 %v1825
        %v1827 = vpop.xlane.xlu0 %1826
        %v1828 = vadd.f32 %v1575, %v1577
        %1829 = vadd.xlane.f32.xlu0 %v1828
        %v1830 = vpop.xlane.xlu0 %1829
        %v1831 = vadd.f32 %v1579, %v1581
        %1832 = vadd.xlane.f32.xlu0 %v1831
        %v1833 = vpop.xlane.xlu0 %1832
        %v1834 = vadd.f32 %v1583, %v1585
        %1835 = vadd.xlane.f32.xlu0 %v1834
        %v1836 = vpop.xlane.xlu0 %1835
        %v1837 = vadd.f32 %v1587, %v1589
        %1838 = vadd.xlane.f32.xlu0 %v1837
        %v1839 = vpop.xlane.xlu0 %1838
        %v1840 = vadd.f32 %v1591, %v1593
        %1841 = vadd.xlane.f32.xlu0 %v1840
        %v1842 = vpop.xlane.xlu0 %1841
        %v1843 = vadd.f32 %v1595, %v1597
        %1844 = vadd.xlane.f32.xlu0 %v1843
        %v1845 = vpop.xlane.xlu0 %1844
        %v1846 = vadd.f32 %v1599, %v1601
        %1847 = vadd.xlane.f32.xlu0 %v1846
        %v1848 = vpop.xlane.xlu0 %1847
        %v1849 = vadd.f32 %v1603, %v1605
        %1850 = vadd.xlane.f32.xlu0 %v1849
        %v1851 = vpop.xlane.xlu0 %1850
        %v1852 = vadd.f32 %v1607, %v1609
        %1853 = vadd.xlane.f32.xlu0 %v1852
        %v1854 = vpop.xlane.xlu0 %1853
        %v1855 = vadd.f32 %v1611, %v1613
        %1856 = vadd.xlane.f32.xlu0 %v1855
        %v1857 = vpop.xlane.xlu0 %1856
        %v1858 = vadd.f32 %v1615, %v1617
        %1859 = vadd.xlane.f32.xlu0 %v1858
        %v1860 = vpop.xlane.xlu0 %1859
        %v1861 = vadd.f32 %v1619, %v1621
        %1862 = vadd.xlane.f32.xlu0 %v1861
        %v1863 = vpop.xlane.xlu0 %1862
        %v1864 = vadd.f32 %v1623, %v1625
        %1865 = vadd.xlane.f32.xlu0 %v1864
        %v1866 = vpop.xlane.xlu0 %1865
        %v1867 = vadd.f32 %v1627, %v1629
        %1868 = vadd.xlane.f32.xlu0 %v1867
        %v1869 = vpop.xlane.xlu0 %1868
        %v1870 = vadd.f32 %v1631, %v1633
        %1871 = vadd.xlane.f32.xlu0 %v1870
        %v1872 = vpop.xlane.xlu0 %1871
        %v1873 = vadd.f32 %v1635, %v1637
        %1874 = vadd.xlane.f32.xlu0 %v1873
        %v1875 = vpop.xlane.xlu0 %1874
        %v1876 = vadd.f32 %v1639, %v1641
        %1877 = vadd.xlane.f32.xlu0 %v1876
        %v1878 = vpop.xlane.xlu0 %1877
        %v1879 = vadd.f32 %v1643, %v1645
        %1880 = vadd.xlane.f32.xlu0 %v1879
        %v1881 = vpop.xlane.xlu0 %1880
        %v1882 = vadd.f32 %v1647, %v1649
        %1883 = vadd.xlane.f32.xlu0 %v1882
        %v1884 = vpop.xlane.xlu0 %1883
        %v1885 = vadd.f32 %v1651, %v1653
        %1886 = vadd.xlane.f32.xlu0 %v1885
        %v1887 = vpop.xlane.xlu0 %1886
        %v1888 = vadd.f32 %v1655, %v1657
        %1889 = vadd.xlane.f32.xlu0 %v1888
        %v1890 = vpop.xlane.xlu0 %1889
        %v1891 = vadd.f32 %v1659, %v1661
        %1892 = vadd.xlane.f32.xlu0 %v1891
        %v1893 = vpop.xlane.xlu0 %1892
        %v1894 = vadd.f32 %v1663, %v1665
        %1895 = vadd.xlane.f32.xlu0 %v1894
        %v1896 = vpop.xlane.xlu0 %1895
        %v1897 = vadd.f32 %v1667, %v1669
        %1898 = vadd.xlane.f32.xlu0 %v1897
        %v1899 = vpop.xlane.xlu0 %1898
        %v1900 = vadd.f32 %v1671, %v1673
        %1901 = vadd.xlane.f32.xlu0 %v1900
        %v1902 = vpop.xlane.xlu0 %1901
        %v1903 = vadd.f32 %v1675, %v1677
        %1904 = vadd.xlane.f32.xlu0 %v1903
        %v1905 = vpop.xlane.xlu0 %1904
        %v1906 = vadd.f32 %v1679, %v1681
        %1907 = vadd.xlane.f32.xlu0 %v1906
        %v1908 = vpop.xlane.xlu0 %1907
        %v1909 = vadd.f32 %v1683, %v1685
        %1910 = vadd.xlane.f32.xlu0 %v1909
        %v1911 = vpop.xlane.xlu0 %1910
        %v1912 = vadd.f32 %v1687, %v1689
        %1913 = vadd.xlane.f32.xlu0 %v1912
        %v1914 = vpop.xlane.xlu0 %1913
        %v1915 = vadd.f32 %v1691, %v1693
        %1916 = vadd.xlane.f32.xlu0 %v1915
        %v1917 = vpop.xlane.xlu0 %1916
        %v1918 = vadd.f32 %v1695, %v1697
        %1919 = vadd.xlane.f32.xlu0 %v1918
        %v1920 = vpop.xlane.xlu0 %1919
        %v1921 = vadd.f32 %v1699, %v1701
        %1922 = vadd.xlane.f32.xlu0 %v1921
        %v1923 = vpop.xlane.xlu0 %1922
        %v1924 = vadd.f32 %v1703, %v1705
        %1925 = vadd.xlane.f32.xlu0 %v1924
        %v1926 = vpop.xlane.xlu0 %1925
        %v1927 = vadd.f32 %v1707, %v1709
        %1928 = vadd.xlane.f32.xlu0 %v1927
        %v1929 = vpop.xlane.xlu0 %1928
        %v1930 = vadd.f32 %v1711, %v1713
        %1931 = vadd.xlane.f32.xlu0 %v1930
        %v1932 = vpop.xlane.xlu0 %1931
        %v1933 = vadd.f32 %v1715, %v1717
        %1934 = vadd.xlane.f32.xlu0 %v1933
        %v1935 = vpop.xlane.xlu0 %1934
        %v1936 = vadd.f32 %v1719, %v1721
        %1937 = vadd.xlane.f32.xlu0 %v1936
        %v1938 = vpop.xlane.xlu0 %1937
        %v1939 = vadd.f32 %v1723, %v1725
        %1940 = vadd.xlane.f32.xlu0 %v1939
        %v1941 = vpop.xlane.xlu0 %1940
        %v1942 = vadd.f32 %v1727, %v1729
        %1943 = vadd.xlane.f32.xlu0 %v1942
        %v1944 = vpop.xlane.xlu0 %1943
        %v1945 = vadd.f32 %v1731, %v1733
        %1946 = vadd.xlane.f32.xlu0 %v1945
        %v1947 = vpop.xlane.xlu0 %1946
        %v1948 = vadd.f32 %v1735, %v1737
        %1949 = vadd.xlane.f32.xlu0 %v1948
        %v1950 = vpop.xlane.xlu0 %1949
        %v1951 = vadd.f32 %v1739, %v1741
        %1952 = vadd.xlane.f32.xlu0 %v1951
        %v1953 = vpop.xlane.xlu0 %1952
        %v1954 = vadd.f32 %v1743, %v1745
        %1955 = vadd.xlane.f32.xlu0 %v1954
        %v1956 = vpop.xlane.xlu0 %1955
        %v1957 = vadd.f32 %v1747, %v1749
        %1958 = vadd.xlane.f32.xlu0 %v1957
        %v1959 = vpop.xlane.xlu0 %1958
        %v1960 = vadd.f32 %v1751, %v1753
        %1961 = vadd.xlane.f32.xlu0 %v1960
        %v1962 = vpop.xlane.xlu0 %1961
        %v1963 = vadd.f32 %v1755, %v1757
        %1964 = vadd.xlane.f32.xlu0 %v1963
        %v1965 = vpop.xlane.xlu0 %1964
        %v1966 = vadd.f32 %v1759, %v1761
        %1967 = vadd.xlane.f32.xlu0 %v1966
        %v1968 = vpop.xlane.xlu0 %1967
        %v1969 = vadd.f32 %v1763, %v1765
        %1970 = vadd.xlane.f32.xlu0 %v1969
        %v1971 = vpop.xlane.xlu0 %1970
        %v1972 = vadd.f32 %v1767, %v1769
        %1973 = vadd.xlane.f32.xlu0 %v1972
        %v1974 = vpop.xlane.xlu0 %1973
        %v1975 = vadd.f32 %v1771, %v1773
        %1976 = vadd.xlane.f32.xlu0 %v1975
        %v1977 = vpop.xlane.xlu0 %1976
        %v1978 = vadd.f32 %v1775, %v1777
        %1979 = vadd.xlane.f32.xlu0 %v1978
        %v1980 = vpop.xlane.xlu0 %1979
        %v1981 = vadd.f32 %v1779, %v1781
        %1982 = vadd.xlane.f32.xlu0 %v1981
        %v1983 = vpop.xlane.xlu0 %1982
        %v1984 = vadd.f32 %v1783, %v1785
        %1985 = vadd.xlane.f32.xlu0 %v1984
        %v1986 = vpop.xlane.xlu0 %1985
        %v1987 = vadd.f32 %v1787, %v1789
        %1988 = vadd.xlane.f32.xlu0 %v1987
        %v1989 = vpop.xlane.xlu0 %1988
        %v1990 = vadd.f32 %v1791, %v1793
        %1991 = vadd.xlane.f32.xlu0 %v1990
        %v1992 = vpop.xlane.xlu0 %1991
        %v1993 = vadd.f32 %v1795, %v1797
        %1994 = vadd.xlane.f32.xlu0 %v1993
        %v1995 = vpop.xlane.xlu0 %1994
        %v1996 = vadd.f32 %v1799, %v1801
        %1997 = vadd.xlane.f32.xlu0 %v1996
        %v1998 = vpop.xlane.xlu0 %1997
        %v1999 = vadd.f32 %v1803, %v1805
        %2000 = vadd.xlane.f32.xlu0 %v1999
        %v2001 = vpop.xlane.xlu0 %2000
        %v2002 = vadd.f32 %v1807, %v1809
        %2003 = vadd.xlane.f32.xlu0 %v2002
        %v2004 = vpop.xlane.xlu0 %2003
        %v2005 = vadd.f32 %v1811, %v1813
        %2006 = vadd.xlane.f32.xlu0 %v2005
        %v2007 = vpop.xlane.xlu0 %2006
        %v2008 = vadd.f32 %v1815, %v1817
        %2009 = vadd.xlane.f32.xlu0 %v2008
        %v2010 = vpop.xlane.xlu0 %2009
        %v2011 = vadd.f32 %v1819, %v1821
        %2012 = vadd.xlane.f32.xlu0 %v2011
        %v2013 = vpop.xlane.xlu0 %2012
        %v2014 = vlaneseq
        %v2015 = vand.u32 %v2014, 127
        %v2016 = vadd.s32 %v2015, 128
        %v2017 = vld [vmem:[%s210] sm:$0xff]
        %v2018 = vld [vmem:[%s210 + $0x8] sm:$0xff]
        %v2019 = vld [vmem:[%s210 + $0x10] sm:$0xff]
        %v2020 = vld [vmem:[%s210 + $0x18] sm:$0xff]
        %v2021 = vld [vmem:[%s210 + $0x20] sm:$0xff]
        %v2022 = vld [vmem:[%s210 + $0x28] sm:$0xff]
        %v2023 = vld [vmem:[%s210 + $0x30] sm:$0xff]
        %v2024 = vld [vmem:[%s210 + $0x38] sm:$0xff]
        %v2025 = vld [vmem:[%s210 + $0x40] sm:$0xff]
        %v2026 = vld [vmem:[%s210 + $0x48] sm:$0xff]
        %v2027 = vld [vmem:[%s210 + $0x50] sm:$0xff]
        %v2028 = vld [vmem:[%s210 + $0x58] sm:$0xff]
        %v2029 = vld [vmem:[%s210 + $0x60] sm:$0xff]
        %v2030 = vld [vmem:[%s210 + $0x68] sm:$0xff]
        %v2031 = vld [vmem:[%s210 + $0x70] sm:$0xff]
        %v2032 = vld [vmem:[%s210 + $0x78] sm:$0xff]
        %v2033 = vld [vmem:[%s210 + $0x80] sm:$0xff]
        %v2034 = vld [vmem:[%s210 + $0x88] sm:$0xff]
        %v2035 = vld [vmem:[%s210 + $0x90] sm:$0xff]
        %v2036 = vld [vmem:[%s210 + $0x98] sm:$0xff]
        %v2037 = vld [vmem:[%s210 + $0xa0] sm:$0xff]
        %v2038 = vld [vmem:[%s210 + $0xa8] sm:$0xff]
        %v2039 = vld [vmem:[%s210 + $0xb0] sm:$0xff]
        %v2040 = vld [vmem:[%s210 + $0xb8] sm:$0xff]
        %v2041 = vld [vmem:[%s210 + $0xc0] sm:$0xff]
        %v2042 = vld [vmem:[%s210 + $0xc8] sm:$0xff]
        %v2043 = vld [vmem:[%s210 + $0xd0] sm:$0xff]
        %v2044 = vld [vmem:[%s210 + $0xd8] sm:$0xff]
        %v2045 = vld [vmem:[%s210 + $0xe0] sm:$0xff]
        %v2046 = vld [vmem:[%s210 + $0xe8] sm:$0xff]
        %v2047 = vld [vmem:[%s210 + $0xf0] sm:$0xff]
        %v2048 = vld [vmem:[%s210 + $0xf8] sm:$0xff]
        %v2049 = vld [vmem:[%s210 + $0x100] sm:$0xff]
        %v2050 = vld [vmem:[%s210 + $0x108] sm:$0xff]
        %v2051 = vld [vmem:[%s210 + $0x110] sm:$0xff]
        %v2052 = vld [vmem:[%s210 + $0x118] sm:$0xff]
        %v2053 = vld [vmem:[%s210 + $0x120] sm:$0xff]
        %v2054 = vld [vmem:[%s210 + $0x128] sm:$0xff]
        %v2055 = vld [vmem:[%s210 + $0x130] sm:$0xff]
        %v2056 = vld [vmem:[%s210 + $0x138] sm:$0xff]
        %v2057 = vld [vmem:[%s210 + $0x140] sm:$0xff]
        %v2058 = vld [vmem:[%s210 + $0x148] sm:$0xff]
        %v2059 = vld [vmem:[%s210 + $0x150] sm:$0xff]
        %v2060 = vld [vmem:[%s210 + $0x158] sm:$0xff]
        %v2061 = vld [vmem:[%s210 + $0x160] sm:$0xff]
        %v2062 = vld [vmem:[%s210 + $0x168] sm:$0xff]
        %v2063 = vld [vmem:[%s210 + $0x170] sm:$0xff]
        %v2064 = vld [vmem:[%s210 + $0x178] sm:$0xff]
        %v2065 = vld [vmem:[%s210 + $0x180] sm:$0xff]
        %v2066 = vld [vmem:[%s210 + $0x188] sm:$0xff]
        %v2067 = vld [vmem:[%s210 + $0x190] sm:$0xff]
        %v2068 = vld [vmem:[%s210 + $0x198] sm:$0xff]
        %v2069 = vld [vmem:[%s210 + $0x1a0] sm:$0xff]
        %v2070 = vld [vmem:[%s210 + $0x1a8] sm:$0xff]
        %v2071 = vld [vmem:[%s210 + $0x1b0] sm:$0xff]
        %v2072 = vld [vmem:[%s210 + $0x1b8] sm:$0xff]
        %v2073 = vld [vmem:[%s210 + $0x1c0] sm:$0xff]
        %v2074 = vld [vmem:[%s210 + $0x1c8] sm:$0xff]
        %v2075 = vld [vmem:[%s210 + $0x1d0] sm:$0xff]
        %v2076 = vld [vmem:[%s210 + $0x1d8] sm:$0xff]
        %v2077 = vld [vmem:[%s210 + $0x1e0] sm:$0xff]
        %v2078 = vld [vmem:[%s210 + $0x1e8] sm:$0xff]
        %v2079 = vld [vmem:[%s210 + $0x1f0] sm:$0xff]
        %v2080 = vld [vmem:[%s210 + $0x1f8] sm:$0xff]
        %2081 = vset.pattern.permute.xlu0 0
        %2082 = vperm.xlu0 %2081, %v2017
        %v2083 = vpop.permute.xlu0 %2082
        %2084 = vset.pattern.permute.xlu0 0
        %2085 = vperm.xlu0 %2084, %v2018
        %v2086 = vpop.permute.xlu0 %2085
        %2087 = vset.pattern.permute.xlu0 0
        %2088 = vperm.xlu0 %2087, %v2019
        %v2089 = vpop.permute.xlu0 %2088
        %2090 = vset.pattern.permute.xlu0 0
        %2091 = vperm.xlu0 %2090, %v2020
        %v2092 = vpop.permute.xlu0 %2091
        %2093 = vset.pattern.permute.xlu0 0
        %2094 = vperm.xlu0 %2093, %v2021
        %v2095 = vpop.permute.xlu0 %2094
        %2096 = vset.pattern.permute.xlu0 0
        %2097 = vperm.xlu0 %2096, %v2022
        %v2098 = vpop.permute.xlu0 %2097
        %2099 = vset.pattern.permute.xlu0 0
        %2100 = vperm.xlu0 %2099, %v2023
        %v2101 = vpop.permute.xlu0 %2100
        %2102 = vset.pattern.permute.xlu0 0
        %2103 = vperm.xlu0 %2102, %v2024
        %v2104 = vpop.permute.xlu0 %2103
        %2105 = vset.pattern.permute.xlu0 0
        %2106 = vperm.xlu0 %2105, %v2025
        %v2107 = vpop.permute.xlu0 %2106
        %2108 = vset.pattern.permute.xlu0 0
        %2109 = vperm.xlu0 %2108, %v2026
        %v2110 = vpop.permute.xlu0 %2109
        %2111 = vset.pattern.permute.xlu0 0
        %2112 = vperm.xlu0 %2111, %v2027
        %v2113 = vpop.permute.xlu0 %2112
        %2114 = vset.pattern.permute.xlu0 0
        %2115 = vperm.xlu0 %2114, %v2028
        %v2116 = vpop.permute.xlu0 %2115
        %2117 = vset.pattern.permute.xlu0 0
        %2118 = vperm.xlu0 %2117, %v2029
        %v2119 = vpop.permute.xlu0 %2118
        %2120 = vset.pattern.permute.xlu0 0
        %2121 = vperm.xlu0 %2120, %v2030
        %v2122 = vpop.permute.xlu0 %2121
        %2123 = vset.pattern.permute.xlu0 0
        %2124 = vperm.xlu0 %2123, %v2031
        %v2125 = vpop.permute.xlu0 %2124
        %2126 = vset.pattern.permute.xlu0 0
        %2127 = vperm.xlu0 %2126, %v2032
        %v2128 = vpop.permute.xlu0 %2127
        %2129 = vset.pattern.permute.xlu0 0
        %2130 = vperm.xlu0 %2129, %v2033
        %v2131 = vpop.permute.xlu0 %2130
        %2132 = vset.pattern.permute.xlu0 0
        %2133 = vperm.xlu0 %2132, %v2034
        %v2134 = vpop.permute.xlu0 %2133
        %2135 = vset.pattern.permute.xlu0 0
        %2136 = vperm.xlu0 %2135, %v2035
        %v2137 = vpop.permute.xlu0 %2136
        %2138 = vset.pattern.permute.xlu0 0
        %2139 = vperm.xlu0 %2138, %v2036
        %v2140 = vpop.permute.xlu0 %2139
        %2141 = vset.pattern.permute.xlu0 0
        %2142 = vperm.xlu0 %2141, %v2037
        %v2143 = vpop.permute.xlu0 %2142
        %2144 = vset.pattern.permute.xlu0 0
        %2145 = vperm.xlu0 %2144, %v2038
        %v2146 = vpop.permute.xlu0 %2145
        %2147 = vset.pattern.permute.xlu0 0
        %2148 = vperm.xlu0 %2147, %v2039
        %v2149 = vpop.permute.xlu0 %2148
        %2150 = vset.pattern.permute.xlu0 0
        %2151 = vperm.xlu0 %2150, %v2040
        %v2152 = vpop.permute.xlu0 %2151
        %2153 = vset.pattern.permute.xlu0 0
        %2154 = vperm.xlu0 %2153, %v2041
        %v2155 = vpop.permute.xlu0 %2154
        %2156 = vset.pattern.permute.xlu0 0
        %2157 = vperm.xlu0 %2156, %v2042
        %v2158 = vpop.permute.xlu0 %2157
        %2159 = vset.pattern.permute.xlu0 0
        %2160 = vperm.xlu0 %2159, %v2043
        %v2161 = vpop.permute.xlu0 %2160
        %2162 = vset.pattern.permute.xlu0 0
        %2163 = vperm.xlu0 %2162, %v2044
        %v2164 = vpop.permute.xlu0 %2163
        %2165 = vset.pattern.permute.xlu0 0
        %2166 = vperm.xlu0 %2165, %v2045
        %v2167 = vpop.permute.xlu0 %2166
        %2168 = vset.pattern.permute.xlu0 0
        %2169 = vperm.xlu0 %2168, %v2046
        %v2170 = vpop.permute.xlu0 %2169
        %2171 = vset.pattern.permute.xlu0 0
        %2172 = vperm.xlu0 %2171, %v2047
        %v2173 = vpop.permute.xlu0 %2172
        %2174 = vset.pattern.permute.xlu0 0
        %2175 = vperm.xlu0 %2174, %v2048
        %v2176 = vpop.permute.xlu0 %2175
        %2177 = vset.pattern.permute.xlu0 0
        %2178 = vperm.xlu0 %2177, %v2049
        %v2179 = vpop.permute.xlu0 %2178
        %2180 = vset.pattern.permute.xlu0 0
        %2181 = vperm.xlu0 %2180, %v2050
        %v2182 = vpop.permute.xlu0 %2181
        %2183 = vset.pattern.permute.xlu0 0
        %2184 = vperm.xlu0 %2183, %v2051
        %v2185 = vpop.permute.xlu0 %2184
        %2186 = vset.pattern.permute.xlu0 0
        %2187 = vperm.xlu0 %2186, %v2052
        %v2188 = vpop.permute.xlu0 %2187
        %2189 = vset.pattern.permute.xlu0 0
        %2190 = vperm.xlu0 %2189, %v2053
        %v2191 = vpop.permute.xlu0 %2190
        %2192 = vset.pattern.permute.xlu0 0
        %2193 = vperm.xlu0 %2192, %v2054
        %v2194 = vpop.permute.xlu0 %2193
        %2195 = vset.pattern.permute.xlu0 0
        %2196 = vperm.xlu0 %2195, %v2055
        %v2197 = vpop.permute.xlu0 %2196
        %2198 = vset.pattern.permute.xlu0 0
        %2199 = vperm.xlu0 %2198, %v2056
        %v2200 = vpop.permute.xlu0 %2199
        %2201 = vset.pattern.permute.xlu0 0
        %2202 = vperm.xlu0 %2201, %v2057
        %v2203 = vpop.permute.xlu0 %2202
        %2204 = vset.pattern.permute.xlu0 0
        %2205 = vperm.xlu0 %2204, %v2058
        %v2206 = vpop.permute.xlu0 %2205
        %2207 = vset.pattern.permute.xlu0 0
        %2208 = vperm.xlu0 %2207, %v2059
        %v2209 = vpop.permute.xlu0 %2208
        %2210 = vset.pattern.permute.xlu0 0
        %2211 = vperm.xlu0 %2210, %v2060
        %v2212 = vpop.permute.xlu0 %2211
        %2213 = vset.pattern.permute.xlu0 0
        %2214 = vperm.xlu0 %2213, %v2061
        %v2215 = vpop.permute.xlu0 %2214
        %2216 = vset.pattern.permute.xlu0 0
        %2217 = vperm.xlu0 %2216, %v2062
        %v2218 = vpop.permute.xlu0 %2217
        %2219 = vset.pattern.permute.xlu0 0
        %2220 = vperm.xlu0 %2219, %v2063
        %v2221 = vpop.permute.xlu0 %2220
        %2222 = vset.pattern.permute.xlu0 0
        %2223 = vperm.xlu0 %2222, %v2064
        %v2224 = vpop.permute.xlu0 %2223
        %2225 = vset.pattern.permute.xlu0 0
        %2226 = vperm.xlu0 %2225, %v2065
        %v2227 = vpop.permute.xlu0 %2226
        %2228 = vset.pattern.permute.xlu0 0
        %2229 = vperm.xlu0 %2228, %v2066
        %v2230 = vpop.permute.xlu0 %2229
        %2231 = vset.pattern.permute.xlu0 0
        %2232 = vperm.xlu0 %2231, %v2067
        %v2233 = vpop.permute.xlu0 %2232
        %2234 = vset.pattern.permute.xlu0 0
        %2235 = vperm.xlu0 %2234, %v2068
        %v2236 = vpop.permute.xlu0 %2235
        %2237 = vset.pattern.permute.xlu0 0
        %2238 = vperm.xlu0 %2237, %v2069
        %v2239 = vpop.permute.xlu0 %2238
        %2240 = vset.pattern.permute.xlu0 0
        %2241 = vperm.xlu0 %2240, %v2070
        %v2242 = vpop.permute.xlu0 %2241
        %2243 = vset.pattern.permute.xlu0 0
        %2244 = vperm.xlu0 %2243, %v2071
        %v2245 = vpop.permute.xlu0 %2244
        %2246 = vset.pattern.permute.xlu0 0
        %2247 = vperm.xlu0 %2246, %v2072
        %v2248 = vpop.permute.xlu0 %2247
        %2249 = vset.pattern.permute.xlu0 0
        %2250 = vperm.xlu0 %2249, %v2073
        %v2251 = vpop.permute.xlu0 %2250
        %2252 = vset.pattern.permute.xlu0 0
        %2253 = vperm.xlu0 %2252, %v2074
        %v2254 = vpop.permute.xlu0 %2253
        %2255 = vset.pattern.permute.xlu0 0
        %2256 = vperm.xlu0 %2255, %v2075
        %v2257 = vpop.permute.xlu0 %2256
        %2258 = vset.pattern.permute.xlu0 0
        %2259 = vperm.xlu0 %2258, %v2076
        %v2260 = vpop.permute.xlu0 %2259
        %2261 = vset.pattern.permute.xlu0 0
        %2262 = vperm.xlu0 %2261, %v2077
        %v2263 = vpop.permute.xlu0 %2262
        %2264 = vset.pattern.permute.xlu0 0
        %2265 = vperm.xlu0 %2264, %v2078
        %v2266 = vpop.permute.xlu0 %2265
        %2267 = vset.pattern.permute.xlu0 0
        %2268 = vperm.xlu0 %2267, %v2079
        %v2269 = vpop.permute.xlu0 %2268
        %2270 = vset.pattern.permute.xlu0 0
        %2271 = vperm.xlu0 %2270, %v2080
        %v2272 = vpop.permute.xlu0 %2271
        %vm2273 = vcmp.eq.s32.totalorder %v2015, %v2083
        %vm2274 = vcmp.eq.s32.totalorder %v2016, %v2083
        %vm2275 = vcmp.eq.s32.totalorder %v2015, %v2086
        %vm2276 = vcmp.eq.s32.totalorder %v2016, %v2086
        %vm2277 = vcmp.eq.s32.totalorder %v2015, %v2089
        %vm2278 = vcmp.eq.s32.totalorder %v2016, %v2089
        %vm2279 = vcmp.eq.s32.totalorder %v2015, %v2092
        %vm2280 = vcmp.eq.s32.totalorder %v2016, %v2092
        %vm2281 = vcmp.eq.s32.totalorder %v2015, %v2095
        %vm2282 = vcmp.eq.s32.totalorder %v2016, %v2095
        %vm2283 = vcmp.eq.s32.totalorder %v2015, %v2098
        %vm2284 = vcmp.eq.s32.totalorder %v2016, %v2098
        %vm2285 = vcmp.eq.s32.totalorder %v2015, %v2101
        %vm2286 = vcmp.eq.s32.totalorder %v2016, %v2101
        %vm2287 = vcmp.eq.s32.totalorder %v2015, %v2104
        %vm2288 = vcmp.eq.s32.totalorder %v2016, %v2104
        %vm2289 = vcmp.eq.s32.totalorder %v2015, %v2107
        %vm2290 = vcmp.eq.s32.totalorder %v2016, %v2107
        %vm2291 = vcmp.eq.s32.totalorder %v2015, %v2110
        %vm2292 = vcmp.eq.s32.totalorder %v2016, %v2110
        %vm2293 = vcmp.eq.s32.totalorder %v2015, %v2113
        %vm2294 = vcmp.eq.s32.totalorder %v2016, %v2113
        %vm2295 = vcmp.eq.s32.totalorder %v2015, %v2116
        %vm2296 = vcmp.eq.s32.totalorder %v2016, %v2116
        %vm2297 = vcmp.eq.s32.totalorder %v2015, %v2119
        %vm2298 = vcmp.eq.s32.totalorder %v2016, %v2119
        %vm2299 = vcmp.eq.s32.totalorder %v2015, %v2122
        %vm2300 = vcmp.eq.s32.totalorder %v2016, %v2122
        %vm2301 = vcmp.eq.s32.totalorder %v2015, %v2125
        %vm2302 = vcmp.eq.s32.totalorder %v2016, %v2125
        %vm2303 = vcmp.eq.s32.totalorder %v2015, %v2128
        %vm2304 = vcmp.eq.s32.totalorder %v2016, %v2128
        %vm2305 = vcmp.eq.s32.totalorder %v2015, %v2131
        %vm2306 = vcmp.eq.s32.totalorder %v2016, %v2131
        %vm2307 = vcmp.eq.s32.totalorder %v2015, %v2134
        %vm2308 = vcmp.eq.s32.totalorder %v2016, %v2134
        %vm2309 = vcmp.eq.s32.totalorder %v2015, %v2137
        %vm2310 = vcmp.eq.s32.totalorder %v2016, %v2137
        %vm2311 = vcmp.eq.s32.totalorder %v2015, %v2140
        %vm2312 = vcmp.eq.s32.totalorder %v2016, %v2140
        %vm2313 = vcmp.eq.s32.totalorder %v2015, %v2143
        %vm2314 = vcmp.eq.s32.totalorder %v2016, %v2143
        %vm2315 = vcmp.eq.s32.totalorder %v2015, %v2146
        %vm2316 = vcmp.eq.s32.totalorder %v2016, %v2146
        %vm2317 = vcmp.eq.s32.totalorder %v2015, %v2149
        %vm2318 = vcmp.eq.s32.totalorder %v2016, %v2149
        %vm2319 = vcmp.eq.s32.totalorder %v2015, %v2152
        %vm2320 = vcmp.eq.s32.totalorder %v2016, %v2152
        %vm2321 = vcmp.eq.s32.totalorder %v2015, %v2155
        %vm2322 = vcmp.eq.s32.totalorder %v2016, %v2155
        %vm2323 = vcmp.eq.s32.totalorder %v2015, %v2158
        %vm2324 = vcmp.eq.s32.totalorder %v2016, %v2158
        %vm2325 = vcmp.eq.s32.totalorder %v2015, %v2161
        %vm2326 = vcmp.eq.s32.totalorder %v2016, %v2161
        %vm2327 = vcmp.eq.s32.totalorder %v2015, %v2164
        %vm2328 = vcmp.eq.s32.totalorder %v2016, %v2164
        %vm2329 = vcmp.eq.s32.totalorder %v2015, %v2167
        %vm2330 = vcmp.eq.s32.totalorder %v2016, %v2167
        %vm2331 = vcmp.eq.s32.totalorder %v2015, %v2170
        %vm2332 = vcmp.eq.s32.totalorder %v2016, %v2170
        %vm2333 = vcmp.eq.s32.totalorder %v2015, %v2173
        %vm2334 = vcmp.eq.s32.totalorder %v2016, %v2173
        %vm2335 = vcmp.eq.s32.totalorder %v2015, %v2176
        %vm2336 = vcmp.eq.s32.totalorder %v2016, %v2176
        %vm2337 = vcmp.eq.s32.totalorder %v2015, %v2179
        %vm2338 = vcmp.eq.s32.totalorder %v2016, %v2179
        %vm2339 = vcmp.eq.s32.totalorder %v2015, %v2182
        %vm2340 = vcmp.eq.s32.totalorder %v2016, %v2182
        %vm2341 = vcmp.eq.s32.totalorder %v2015, %v2185
        %vm2342 = vcmp.eq.s32.totalorder %v2016, %v2185
        %vm2343 = vcmp.eq.s32.totalorder %v2015, %v2188
        %vm2344 = vcmp.eq.s32.totalorder %v2016, %v2188
        %vm2345 = vcmp.eq.s32.totalorder %v2015, %v2191
        %vm2346 = vcmp.eq.s32.totalorder %v2016, %v2191
        %vm2347 = vcmp.eq.s32.totalorder %v2015, %v2194
        %vm2348 = vcmp.eq.s32.totalorder %v2016, %v2194
        %vm2349 = vcmp.eq.s32.totalorder %v2015, %v2197
        %vm2350 = vcmp.eq.s32.totalorder %v2016, %v2197
        %vm2351 = vcmp.eq.s32.totalorder %v2015, %v2200
        %vm2352 = vcmp.eq.s32.totalorder %v2016, %v2200
        %vm2353 = vcmp.eq.s32.totalorder %v2015, %v2203
        %vm2354 = vcmp.eq.s32.totalorder %v2016, %v2203
        %vm2355 = vcmp.eq.s32.totalorder %v2015, %v2206
        %vm2356 = vcmp.eq.s32.totalorder %v2016, %v2206
        %vm2357 = vcmp.eq.s32.totalorder %v2015, %v2209
        %vm2358 = vcmp.eq.s32.totalorder %v2016, %v2209
        %vm2359 = vcmp.eq.s32.totalorder %v2015, %v2212
        %vm2360 = vcmp.eq.s32.totalorder %v2016, %v2212
        %vm2361 = vcmp.eq.s32.totalorder %v2015, %v2215
        %vm2362 = vcmp.eq.s32.totalorder %v2016, %v2215
        %vm2363 = vcmp.eq.s32.totalorder %v2015, %v2218
        %vm2364 = vcmp.eq.s32.totalorder %v2016, %v2218
        %vm2365 = vcmp.eq.s32.totalorder %v2015, %v2221
        %vm2366 = vcmp.eq.s32.totalorder %v2016, %v2221
        %vm2367 = vcmp.eq.s32.totalorder %v2015, %v2224
        %vm2368 = vcmp.eq.s32.totalorder %v2016, %v2224
        %vm2369 = vcmp.eq.s32.totalorder %v2015, %v2227
        %vm2370 = vcmp.eq.s32.totalorder %v2016, %v2227
        %vm2371 = vcmp.eq.s32.totalorder %v2015, %v2230
        %vm2372 = vcmp.eq.s32.totalorder %v2016, %v2230
        %vm2373 = vcmp.eq.s32.totalorder %v2015, %v2233
        %vm2374 = vcmp.eq.s32.totalorder %v2016, %v2233
        %vm2375 = vcmp.eq.s32.totalorder %v2015, %v2236
        %vm2376 = vcmp.eq.s32.totalorder %v2016, %v2236
        %vm2377 = vcmp.eq.s32.totalorder %v2015, %v2239
        %vm2378 = vcmp.eq.s32.totalorder %v2016, %v2239
        %vm2379 = vcmp.eq.s32.totalorder %v2015, %v2242
        %vm2380 = vcmp.eq.s32.totalorder %v2016, %v2242
        %vm2381 = vcmp.eq.s32.totalorder %v2015, %v2245
        %vm2382 = vcmp.eq.s32.totalorder %v2016, %v2245
        %vm2383 = vcmp.eq.s32.totalorder %v2015, %v2248
        %vm2384 = vcmp.eq.s32.totalorder %v2016, %v2248
        %vm2385 = vcmp.eq.s32.totalorder %v2015, %v2251
        %vm2386 = vcmp.eq.s32.totalorder %v2016, %v2251
        %vm2387 = vcmp.eq.s32.totalorder %v2015, %v2254
        %vm2388 = vcmp.eq.s32.totalorder %v2016, %v2254
        %vm2389 = vcmp.eq.s32.totalorder %v2015, %v2257
        %vm2390 = vcmp.eq.s32.totalorder %v2016, %v2257
        %vm2391 = vcmp.eq.s32.totalorder %v2015, %v2260
        %vm2392 = vcmp.eq.s32.totalorder %v2016, %v2260
        %vm2393 = vcmp.eq.s32.totalorder %v2015, %v2263
        %vm2394 = vcmp.eq.s32.totalorder %v2016, %v2263
        %vm2395 = vcmp.eq.s32.totalorder %v2015, %v2266
        %vm2396 = vcmp.eq.s32.totalorder %v2016, %v2266
        %vm2397 = vcmp.eq.s32.totalorder %v2015, %v2269
        %vm2398 = vcmp.eq.s32.totalorder %v2016, %v2269
        %vm2399 = vcmp.eq.s32.totalorder %v2015, %v2272
        %vm2400 = vcmp.eq.s32.totalorder %v2016, %v2272
        %v2401 = vsel %vm2273, %v1438, 0.0
        %v2402 = vsel %vm2274, %v1439, 0.0
        %v2403 = vsel %vm2275, %v1440, 0.0
        %v2404 = vsel %vm2276, %v1441, 0.0
        %v2405 = vsel %vm2277, %v1442, 0.0
        %v2406 = vsel %vm2278, %v1443, 0.0
        %v2407 = vsel %vm2279, %v1444, 0.0
        %v2408 = vsel %vm2280, %v1445, 0.0
        %v2409 = vsel %vm2281, %v1446, 0.0
        %v2410 = vsel %vm2282, %v1447, 0.0
        %v2411 = vsel %vm2283, %v1448, 0.0
        %v2412 = vsel %vm2284, %v1449, 0.0
        %v2413 = vsel %vm2285, %v1450, 0.0
        %v2414 = vsel %vm2286, %v1451, 0.0
        %v2415 = vsel %vm2287, %v1452, 0.0
        %v2416 = vsel %vm2288, %v1453, 0.0
        %v2417 = vsel %vm2289, %v1454, 0.0
        %v2418 = vsel %vm2290, %v1455, 0.0
        %v2419 = vsel %vm2291, %v1456, 0.0
        %v2420 = vsel %vm2292, %v1457, 0.0
        %v2421 = vsel %vm2293, %v1458, 0.0
        %v2422 = vsel %vm2294, %v1459, 0.0
        %v2423 = vsel %vm2295, %v1460, 0.0
        %v2424 = vsel %vm2296, %v1461, 0.0
        %v2425 = vsel %vm2297, %v1462, 0.0
        %v2426 = vsel %vm2298, %v1463, 0.0
        %v2427 = vsel %vm2299, %v1464, 0.0
        %v2428 = vsel %vm2300, %v1465, 0.0
        %v2429 = vsel %vm2301, %v1466, 0.0
        %v2430 = vsel %vm2302, %v1467, 0.0
        %v2431 = vsel %vm2303, %v1468, 0.0
        %v2432 = vsel %vm2304, %v1469, 0.0
        %v2433 = vsel %vm2305, %v1470, 0.0
        %v2434 = vsel %vm2306, %v1471, 0.0
        %v2435 = vsel %vm2307, %v1472, 0.0
        %v2436 = vsel %vm2308, %v1473, 0.0
        %v2437 = vsel %vm2309, %v1474, 0.0
        %v2438 = vsel %vm2310, %v1475, 0.0
        %v2439 = vsel %vm2311, %v1476, 0.0
        %v2440 = vsel %vm2312, %v1477, 0.0
        %v2441 = vsel %vm2313, %v1478, 0.0
        %v2442 = vsel %vm2314, %v1479, 0.0
        %v2443 = vsel %vm2315, %v1480, 0.0
        %v2444 = vsel %vm2316, %v1481, 0.0
        %v2445 = vsel %vm2317, %v1482, 0.0
        %v2446 = vsel %vm2318, %v1483, 0.0
        %v2447 = vsel %vm2319, %v1484, 0.0
        %v2448 = vsel %vm2320, %v1485, 0.0
        %v2449 = vsel %vm2321, %v1486, 0.0
        %v2450 = vsel %vm2322, %v1487, 0.0
        %v2451 = vsel %vm2323, %v1488, 0.0
        %v2452 = vsel %vm2324, %v1489, 0.0
        %v2453 = vsel %vm2325, %v1490, 0.0
        %v2454 = vsel %vm2326, %v1491, 0.0
        %v2455 = vsel %vm2327, %v1492, 0.0
        %v2456 = vsel %vm2328, %v1493, 0.0
        %v2457 = vsel %vm2329, %v1494, 0.0
        %v2458 = vsel %vm2330, %v1495, 0.0
        %v2459 = vsel %vm2331, %v1496, 0.0
        %v2460 = vsel %vm2332, %v1497, 0.0
        %v2461 = vsel %vm2333, %v1498, 0.0
        %v2462 = vsel %vm2334, %v1499, 0.0
        %v2463 = vsel %vm2335, %v1500, 0.0
        %v2464 = vsel %vm2336, %v1501, 0.0
        %v2465 = vsel %vm2337, %v1502, 0.0
        %v2466 = vsel %vm2338, %v1503, 0.0
        %v2467 = vsel %vm2339, %v1504, 0.0
        %v2468 = vsel %vm2340, %v1505, 0.0
        %v2469 = vsel %vm2341, %v1506, 0.0
        %v2470 = vsel %vm2342, %v1507, 0.0
        %v2471 = vsel %vm2343, %v1508, 0.0
        %v2472 = vsel %vm2344, %v1509, 0.0
        %v2473 = vsel %vm2345, %v1510, 0.0
        %v2474 = vsel %vm2346, %v1511, 0.0
        %v2475 = vsel %vm2347, %v1512, 0.0
        %v2476 = vsel %vm2348, %v1513, 0.0
        %v2477 = vsel %vm2349, %v1514, 0.0
        %v2478 = vsel %vm2350, %v1515, 0.0
        %v2479 = vsel %vm2351, %v1516, 0.0
        %v2480 = vsel %vm2352, %v1517, 0.0
        %v2481 = vsel %vm2353, %v1518, 0.0
        %v2482 = vsel %vm2354, %v1519, 0.0
        %v2483 = vsel %vm2355, %v1520, 0.0
        %v2484 = vsel %vm2356, %v1521, 0.0
        %v2485 = vsel %vm2357, %v1522, 0.0
        %v2486 = vsel %vm2358, %v1523, 0.0
        %v2487 = vsel %vm2359, %v1524, 0.0
        %v2488 = vsel %vm2360, %v1525, 0.0
        %v2489 = vsel %vm2361, %v1526, 0.0
        %v2490 = vsel %vm2362, %v1527, 0.0
        %v2491 = vsel %vm2363, %v1528, 0.0
        %v2492 = vsel %vm2364, %v1529, 0.0
        %v2493 = vsel %vm2365, %v1530, 0.0
        %v2494 = vsel %vm2366, %v1531, 0.0
        %v2495 = vsel %vm2367, %v1532, 0.0
        %v2496 = vsel %vm2368, %v1533, 0.0
        %v2497 = vsel %vm2369, %v1534, 0.0
        %v2498 = vsel %vm2370, %v1535, 0.0
        %v2499 = vsel %vm2371, %v1536, 0.0
        %v2500 = vsel %vm2372, %v1537, 0.0
        %v2501 = vsel %vm2373, %v1538, 0.0
        %v2502 = vsel %vm2374, %v1539, 0.0
        %v2503 = vsel %vm2375, %v1540, 0.0
        %v2504 = vsel %vm2376, %v1541, 0.0
        %v2505 = vsel %vm2377, %v1542, 0.0
        %v2506 = vsel %vm2378, %v1543, 0.0
        %v2507 = vsel %vm2379, %v1544, 0.0
        %v2508 = vsel %vm2380, %v1545, 0.0
        %v2509 = vsel %vm2381, %v1546, 0.0
        %v2510 = vsel %vm2382, %v1547, 0.0
        %v2511 = vsel %vm2383, %v1548, 0.0
        %v2512 = vsel %vm2384, %v1549, 0.0
        %v2513 = vsel %vm2385, %v1550, 0.0
        %v2514 = vsel %vm2386, %v1551, 0.0
        %v2515 = vsel %vm2387, %v1552, 0.0
        %v2516 = vsel %vm2388, %v1553, 0.0
        %v2517 = vsel %vm2389, %v1554, 0.0
        %v2518 = vsel %vm2390, %v1555, 0.0
        %v2519 = vsel %vm2391, %v1556, 0.0
        %v2520 = vsel %vm2392, %v1557, 0.0
        %v2521 = vsel %vm2393, %v1558, 0.0
        %v2522 = vsel %vm2394, %v1559, 0.0
        %v2523 = vsel %vm2395, %v1560, 0.0
        %v2524 = vsel %vm2396, %v1561, 0.0
        %v2525 = vsel %vm2397, %v1562, 0.0
        %v2526 = vsel %vm2398, %v1563, 0.0
        %v2527 = vsel %vm2399, %v1564, 0.0
        %v2528 = vsel %vm2400, %v1565, 0.0
        %v2529 = vadd.f32 %v2401, %v2402
        %2530 = vadd.xlane.f32.xlu0 %v2529
        %v2531 = vpop.xlane.xlu0 %2530
        %v2532 = vadd.f32 %v2403, %v2404
        %2533 = vadd.xlane.f32.xlu0 %v2532
        %v2534 = vpop.xlane.xlu0 %2533
        %v2535 = vadd.f32 %v2405, %v2406
        %2536 = vadd.xlane.f32.xlu0 %v2535
        %v2537 = vpop.xlane.xlu0 %2536
        %v2538 = vadd.f32 %v2407, %v2408
        %2539 = vadd.xlane.f32.xlu0 %v2538
        %v2540 = vpop.xlane.xlu0 %2539
        %v2541 = vadd.f32 %v2409, %v2410
        %2542 = vadd.xlane.f32.xlu0 %v2541
        %v2543 = vpop.xlane.xlu0 %2542
        %v2544 = vadd.f32 %v2411, %v2412
        %2545 = vadd.xlane.f32.xlu0 %v2544
        %v2546 = vpop.xlane.xlu0 %2545
        %v2547 = vadd.f32 %v2413, %v2414
        %2548 = vadd.xlane.f32.xlu0 %v2547
        %v2549 = vpop.xlane.xlu0 %2548
        %v2550 = vadd.f32 %v2415, %v2416
        %2551 = vadd.xlane.f32.xlu0 %v2550
        %v2552 = vpop.xlane.xlu0 %2551
        %v2553 = vadd.f32 %v2417, %v2418
        %2554 = vadd.xlane.f32.xlu0 %v2553
        %v2555 = vpop.xlane.xlu0 %2554
        %v2556 = vadd.f32 %v2419, %v2420
        %2557 = vadd.xlane.f32.xlu0 %v2556
        %v2558 = vpop.xlane.xlu0 %2557
        %v2559 = vadd.f32 %v2421, %v2422
        %2560 = vadd.xlane.f32.xlu0 %v2559
        %v2561 = vpop.xlane.xlu0 %2560
        %v2562 = vadd.f32 %v2423, %v2424
        %2563 = vadd.xlane.f32.xlu0 %v2562
        %v2564 = vpop.xlane.xlu0 %2563
        %v2565 = vadd.f32 %v2425, %v2426
        %2566 = vadd.xlane.f32.xlu0 %v2565
        %v2567 = vpop.xlane.xlu0 %2566
        %v2568 = vadd.f32 %v2427, %v2428
        %2569 = vadd.xlane.f32.xlu0 %v2568
        %v2570 = vpop.xlane.xlu0 %2569
        %v2571 = vadd.f32 %v2429, %v2430
        %2572 = vadd.xlane.f32.xlu0 %v2571
        %v2573 = vpop.xlane.xlu0 %2572
        %v2574 = vadd.f32 %v2431, %v2432
        %2575 = vadd.xlane.f32.xlu0 %v2574
        %v2576 = vpop.xlane.xlu0 %2575
        %v2577 = vadd.f32 %v2433, %v2434
        %2578 = vadd.xlane.f32.xlu0 %v2577
        %v2579 = vpop.xlane.xlu0 %2578
        %v2580 = vadd.f32 %v2435, %v2436
        %2581 = vadd.xlane.f32.xlu0 %v2580
        %v2582 = vpop.xlane.xlu0 %2581
        %v2583 = vadd.f32 %v2437, %v2438
        %2584 = vadd.xlane.f32.xlu0 %v2583
        %v2585 = vpop.xlane.xlu0 %2584
        %v2586 = vadd.f32 %v2439, %v2440
        %2587 = vadd.xlane.f32.xlu0 %v2586
        %v2588 = vpop.xlane.xlu0 %2587
        %v2589 = vadd.f32 %v2441, %v2442
        %2590 = vadd.xlane.f32.xlu0 %v2589
        %v2591 = vpop.xlane.xlu0 %2590
        %v2592 = vadd.f32 %v2443, %v2444
        %2593 = vadd.xlane.f32.xlu0 %v2592
        %v2594 = vpop.xlane.xlu0 %2593
        %v2595 = vadd.f32 %v2445, %v2446
        %2596 = vadd.xlane.f32.xlu0 %v2595
        %v2597 = vpop.xlane.xlu0 %2596
        %v2598 = vadd.f32 %v2447, %v2448
        %2599 = vadd.xlane.f32.xlu0 %v2598
        %v2600 = vpop.xlane.xlu0 %2599
        %v2601 = vadd.f32 %v2449, %v2450
        %2602 = vadd.xlane.f32.xlu0 %v2601
        %v2603 = vpop.xlane.xlu0 %2602
        %v2604 = vadd.f32 %v2451, %v2452
        %2605 = vadd.xlane.f32.xlu0 %v2604
        %v2606 = vpop.xlane.xlu0 %2605
        %v2607 = vadd.f32 %v2453, %v2454
        %2608 = vadd.xlane.f32.xlu0 %v2607
        %v2609 = vpop.xlane.xlu0 %2608
        %v2610 = vadd.f32 %v2455, %v2456
        %2611 = vadd.xlane.f32.xlu0 %v2610
        %v2612 = vpop.xlane.xlu0 %2611
        %v2613 = vadd.f32 %v2457, %v2458
        %2614 = vadd.xlane.f32.xlu0 %v2613
        %v2615 = vpop.xlane.xlu0 %2614
        %v2616 = vadd.f32 %v2459, %v2460
        %2617 = vadd.xlane.f32.xlu0 %v2616
        %v2618 = vpop.xlane.xlu0 %2617
        %v2619 = vadd.f32 %v2461, %v2462
        %2620 = vadd.xlane.f32.xlu0 %v2619
        %v2621 = vpop.xlane.xlu0 %2620
        %v2622 = vadd.f32 %v2463, %v2464
        %2623 = vadd.xlane.f32.xlu0 %v2622
        %v2624 = vpop.xlane.xlu0 %2623
        %v2625 = vadd.f32 %v2465, %v2466
        %2626 = vadd.xlane.f32.xlu0 %v2625
        %v2627 = vpop.xlane.xlu0 %2626
        %v2628 = vadd.f32 %v2467, %v2468
        %2629 = vadd.xlane.f32.xlu0 %v2628
        %v2630 = vpop.xlane.xlu0 %2629
        %v2631 = vadd.f32 %v2469, %v2470
        %2632 = vadd.xlane.f32.xlu0 %v2631
        %v2633 = vpop.xlane.xlu0 %2632
        %v2634 = vadd.f32 %v2471, %v2472
        %2635 = vadd.xlane.f32.xlu0 %v2634
        %v2636 = vpop.xlane.xlu0 %2635
        %v2637 = vadd.f32 %v2473, %v2474
        %2638 = vadd.xlane.f32.xlu0 %v2637
        %v2639 = vpop.xlane.xlu0 %2638
        %v2640 = vadd.f32 %v2475, %v2476
        %2641 = vadd.xlane.f32.xlu0 %v2640
        %v2642 = vpop.xlane.xlu0 %2641
        %v2643 = vadd.f32 %v2477, %v2478
        %2644 = vadd.xlane.f32.xlu0 %v2643
        %v2645 = vpop.xlane.xlu0 %2644
        %v2646 = vadd.f32 %v2479, %v2480
        %2647 = vadd.xlane.f32.xlu0 %v2646
        %v2648 = vpop.xlane.xlu0 %2647
        %v2649 = vadd.f32 %v2481, %v2482
        %2650 = vadd.xlane.f32.xlu0 %v2649
        %v2651 = vpop.xlane.xlu0 %2650
        %v2652 = vadd.f32 %v2483, %v2484
        %2653 = vadd.xlane.f32.xlu0 %v2652
        %v2654 = vpop.xlane.xlu0 %2653
        %v2655 = vadd.f32 %v2485, %v2486
        %2656 = vadd.xlane.f32.xlu0 %v2655
        %v2657 = vpop.xlane.xlu0 %2656
        %v2658 = vadd.f32 %v2487, %v2488
        %2659 = vadd.xlane.f32.xlu0 %v2658
        %v2660 = vpop.xlane.xlu0 %2659
        %v2661 = vadd.f32 %v2489, %v2490
        %2662 = vadd.xlane.f32.xlu0 %v2661
        %v2663 = vpop.xlane.xlu0 %2662
        %v2664 = vadd.f32 %v2491, %v2492
        %2665 = vadd.xlane.f32.xlu0 %v2664
        %v2666 = vpop.xlane.xlu0 %2665
        %v2667 = vadd.f32 %v2493, %v2494
        %2668 = vadd.xlane.f32.xlu0 %v2667
        %v2669 = vpop.xlane.xlu0 %2668
        %v2670 = vadd.f32 %v2495, %v2496
        %2671 = vadd.xlane.f32.xlu0 %v2670
        %v2672 = vpop.xlane.xlu0 %2671
        %v2673 = vadd.f32 %v2497, %v2498
        %2674 = vadd.xlane.f32.xlu0 %v2673
        %v2675 = vpop.xlane.xlu0 %2674
        %v2676 = vadd.f32 %v2499, %v2500
        %2677 = vadd.xlane.f32.xlu0 %v2676
        %v2678 = vpop.xlane.xlu0 %2677
        %v2679 = vadd.f32 %v2501, %v2502
        %2680 = vadd.xlane.f32.xlu0 %v2679
        %v2681 = vpop.xlane.xlu0 %2680
        %v2682 = vadd.f32 %v2503, %v2504
        %2683 = vadd.xlane.f32.xlu0 %v2682
        %v2684 = vpop.xlane.xlu0 %2683
        %v2685 = vadd.f32 %v2505, %v2506
        %2686 = vadd.xlane.f32.xlu0 %v2685
        %v2687 = vpop.xlane.xlu0 %2686
        %v2688 = vadd.f32 %v2507, %v2508
        %2689 = vadd.xlane.f32.xlu0 %v2688
        %v2690 = vpop.xlane.xlu0 %2689
        %v2691 = vadd.f32 %v2509, %v2510
        %2692 = vadd.xlane.f32.xlu0 %v2691
        %v2693 = vpop.xlane.xlu0 %2692
        %v2694 = vadd.f32 %v2511, %v2512
        %2695 = vadd.xlane.f32.xlu0 %v2694
        %v2696 = vpop.xlane.xlu0 %2695
        %v2697 = vadd.f32 %v2513, %v2514
        %2698 = vadd.xlane.f32.xlu0 %v2697
        %v2699 = vpop.xlane.xlu0 %2698
        %v2700 = vadd.f32 %v2515, %v2516
        %2701 = vadd.xlane.f32.xlu0 %v2700
        %v2702 = vpop.xlane.xlu0 %2701
        %v2703 = vadd.f32 %v2517, %v2518
        %2704 = vadd.xlane.f32.xlu0 %v2703
        %v2705 = vpop.xlane.xlu0 %2704
        %v2706 = vadd.f32 %v2519, %v2520
        %2707 = vadd.xlane.f32.xlu0 %v2706
        %v2708 = vpop.xlane.xlu0 %2707
        %v2709 = vadd.f32 %v2521, %v2522
        %2710 = vadd.xlane.f32.xlu0 %v2709
        %v2711 = vpop.xlane.xlu0 %2710
        %v2712 = vadd.f32 %v2523, %v2524
        %2713 = vadd.xlane.f32.xlu0 %v2712
        %v2714 = vpop.xlane.xlu0 %2713
        %v2715 = vadd.f32 %v2525, %v2526
        %2716 = vadd.xlane.f32.xlu0 %v2715
        %v2717 = vpop.xlane.xlu0 %2716
        %v2718 = vadd.f32 %v2527, %v2528
        %2719 = vadd.xlane.f32.xlu0 %v2718
        %v2720 = vpop.xlane.xlu0 %2719
        %v2721 = vlog2.pop %v1824
        %v2722 = vmul.f32 %v2721, 0.6931472
        %v2723 = vlog2.pop %v1827
        %v2724 = vmul.f32 %v2723, 0.6931472
        %v2725 = vlog2.pop %v1830
        %v2726 = vmul.f32 %v2725, 0.6931472
        %v2727 = vlog2.pop %v1833
        %v2728 = vmul.f32 %v2727, 0.6931472
        %v2729 = vlog2.pop %v1836
        %v2730 = vmul.f32 %v2729, 0.6931472
        %v2731 = vlog2.pop %v1839
        %v2732 = vmul.f32 %v2731, 0.6931472
        %v2733 = vlog2.pop %v1842
        %v2734 = vmul.f32 %v2733, 0.6931472
        %v2735 = vlog2.pop %v1845
        %v2736 = vmul.f32 %v2735, 0.6931472
        %v2737 = vlog2.pop %v1848
        %v2738 = vmul.f32 %v2737, 0.6931472
        %v2739 = vlog2.pop %v1851
        %v2740 = vmul.f32 %v2739, 0.6931472
        %v2741 = vlog2.pop %v1854
        %v2742 = vmul.f32 %v2741, 0.6931472
        %v2743 = vlog2.pop %v1857
        %v2744 = vmul.f32 %v2743, 0.6931472
        %v2745 = vlog2.pop %v1860
        %v2746 = vmul.f32 %v2745, 0.6931472
        %v2747 = vlog2.pop %v1863
        %v2748 = vmul.f32 %v2747, 0.6931472
        %v2749 = vlog2.pop %v1866
        %v2750 = vmul.f32 %v2749, 0.6931472
        %v2751 = vlog2.pop %v1869
        %v2752 = vmul.f32 %v2751, 0.6931472
        %v2753 = vlog2.pop %v1872
        %v2754 = vmul.f32 %v2753, 0.6931472
        %v2755 = vlog2.pop %v1875
        %v2756 = vmul.f32 %v2755, 0.6931472
        %v2757 = vlog2.pop %v1878
        %v2758 = vmul.f32 %v2757, 0.6931472
        %v2759 = vlog2.pop %v1881
        %v2760 = vmul.f32 %v2759, 0.6931472
        %v2761 = vlog2.pop %v1884
        %v2762 = vmul.f32 %v2761, 0.6931472
        %v2763 = vlog2.pop %v1887
        %v2764 = vmul.f32 %v2763, 0.6931472
        %v2765 = vlog2.pop %v1890
        %v2766 = vmul.f32 %v2765, 0.6931472
        %v2767 = vlog2.pop %v1893
        %v2768 = vmul.f32 %v2767, 0.6931472
        %v2769 = vlog2.pop %v1896
        %v2770 = vmul.f32 %v2769, 0.6931472
        %v2771 = vlog2.pop %v1899
        %v2772 = vmul.f32 %v2771, 0.6931472
        %v2773 = vlog2.pop %v1902
        %v2774 = vmul.f32 %v2773, 0.6931472
        %v2775 = vlog2.pop %v1905
        %v2776 = vmul.f32 %v2775, 0.6931472
        %v2777 = vlog2.pop %v1908
        %v2778 = vmul.f32 %v2777, 0.6931472
        %v2779 = vlog2.pop %v1911
        %v2780 = vmul.f32 %v2779, 0.6931472
        %v2781 = vlog2.pop %v1914
        %v2782 = vmul.f32 %v2781, 0.6931472
        %v2783 = vlog2.pop %v1917
        %v2784 = vmul.f32 %v2783, 0.6931472
        %v2785 = vlog2.pop %v1920
        %v2786 = vmul.f32 %v2785, 0.6931472
        %v2787 = vlog2.pop %v1923
        %v2788 = vmul.f32 %v2787, 0.6931472
        %v2789 = vlog2.pop %v1926
        %v2790 = vmul.f32 %v2789, 0.6931472
        %v2791 = vlog2.pop %v1929
        %v2792 = vmul.f32 %v2791, 0.6931472
        %v2793 = vlog2.pop %v1932
        %v2794 = vmul.f32 %v2793, 0.6931472
        %v2795 = vlog2.pop %v1935
        %v2796 = vmul.f32 %v2795, 0.6931472
        %v2797 = vlog2.pop %v1938
        %v2798 = vmul.f32 %v2797, 0.6931472
        %v2799 = vlog2.pop %v1941
        %v2800 = vmul.f32 %v2799, 0.6931472
        %v2801 = vlog2.pop %v1944
        %v2802 = vmul.f32 %v2801, 0.6931472
        %v2803 = vlog2.pop %v1947
        %v2804 = vmul.f32 %v2803, 0.6931472
        %v2805 = vlog2.pop %v1950
        %v2806 = vmul.f32 %v2805, 0.6931472
        %v2807 = vlog2.pop %v1953
        %v2808 = vmul.f32 %v2807, 0.6931472
        %v2809 = vlog2.pop %v1956
        %v2810 = vmul.f32 %v2809, 0.6931472
        %v2811 = vlog2.pop %v1959
        %v2812 = vmul.f32 %v2811, 0.6931472
        %v2813 = vlog2.pop %v1962
        %v2814 = vmul.f32 %v2813, 0.6931472
        %v2815 = vlog2.pop %v1965
        %v2816 = vmul.f32 %v2815, 0.6931472
        %v2817 = vlog2.pop %v1968
        %v2818 = vmul.f32 %v2817, 0.6931472
        %v2819 = vlog2.pop %v1971
        %v2820 = vmul.f32 %v2819, 0.6931472
        %v2821 = vlog2.pop %v1974
        %v2822 = vmul.f32 %v2821, 0.6931472
        %v2823 = vlog2.pop %v1977
        %v2824 = vmul.f32 %v2823, 0.6931472
        %v2825 = vlog2.pop %v1980
        %v2826 = vmul.f32 %v2825, 0.6931472
        %v2827 = vlog2.pop %v1983
        %v2828 = vmul.f32 %v2827, 0.6931472
        %v2829 = vlog2.pop %v1986
        %v2830 = vmul.f32 %v2829, 0.6931472
        %v2831 = vlog2.pop %v1989
        %v2832 = vmul.f32 %v2831, 0.6931472
        %v2833 = vlog2.pop %v1992
        %v2834 = vmul.f32 %v2833, 0.6931472
        %v2835 = vlog2.pop %v1995
        %v2836 = vmul.f32 %v2835, 0.6931472
        %v2837 = vlog2.pop %v1998
        %v2838 = vmul.f32 %v2837, 0.6931472
        %v2839 = vlog2.pop %v2001
        %v2840 = vmul.f32 %v2839, 0.6931472
        %v2841 = vlog2.pop %v2004
        %v2842 = vmul.f32 %v2841, 0.6931472
        %v2843 = vlog2.pop %v2007
        %v2844 = vmul.f32 %v2843, 0.6931472
        %v2845 = vlog2.pop %v2010
        %v2846 = vmul.f32 %v2845, 0.6931472
        %v2847 = vlog2.pop %v2013
        %v2848 = vmul.f32 %v2847, 0.6931472
        %v2849 = vsub.f32 %v2722, %v2531
        %v2850 = vsub.f32 %v2724, %v2534
        %v2851 = vsub.f32 %v2726, %v2537
        %v2852 = vsub.f32 %v2728, %v2540
        %v2853 = vsub.f32 %v2730, %v2543
        %v2854 = vsub.f32 %v2732, %v2546
        %v2855 = vsub.f32 %v2734, %v2549
        %v2856 = vsub.f32 %v2736, %v2552
        %v2857 = vsub.f32 %v2738, %v2555
        %v2858 = vsub.f32 %v2740, %v2558
        %v2859 = vsub.f32 %v2742, %v2561
        %v2860 = vsub.f32 %v2744, %v2564
        %v2861 = vsub.f32 %v2746, %v2567
        %v2862 = vsub.f32 %v2748, %v2570
        %v2863 = vsub.f32 %v2750, %v2573
        %v2864 = vsub.f32 %v2752, %v2576
        %v2865 = vsub.f32 %v2754, %v2579
        %v2866 = vsub.f32 %v2756, %v2582
        %v2867 = vsub.f32 %v2758, %v2585
        %v2868 = vsub.f32 %v2760, %v2588
        %v2869 = vsub.f32 %v2762, %v2591
        %v2870 = vsub.f32 %v2764, %v2594
        %v2871 = vsub.f32 %v2766, %v2597
        %v2872 = vsub.f32 %v2768, %v2600
        %v2873 = vsub.f32 %v2770, %v2603
        %v2874 = vsub.f32 %v2772, %v2606
        %v2875 = vsub.f32 %v2774, %v2609
        %v2876 = vsub.f32 %v2776, %v2612
        %v2877 = vsub.f32 %v2778, %v2615
        %v2878 = vsub.f32 %v2780, %v2618
        %v2879 = vsub.f32 %v2782, %v2621
        %v2880 = vsub.f32 %v2784, %v2624
        %v2881 = vsub.f32 %v2786, %v2627
        %v2882 = vsub.f32 %v2788, %v2630
        %v2883 = vsub.f32 %v2790, %v2633
        %v2884 = vsub.f32 %v2792, %v2636
        %v2885 = vsub.f32 %v2794, %v2639
        %v2886 = vsub.f32 %v2796, %v2642
        %v2887 = vsub.f32 %v2798, %v2645
        %v2888 = vsub.f32 %v2800, %v2648
        %v2889 = vsub.f32 %v2802, %v2651
        %v2890 = vsub.f32 %v2804, %v2654
        %v2891 = vsub.f32 %v2806, %v2657
        %v2892 = vsub.f32 %v2808, %v2660
        %v2893 = vsub.f32 %v2810, %v2663
        %v2894 = vsub.f32 %v2812, %v2666
        %v2895 = vsub.f32 %v2814, %v2669
        %v2896 = vsub.f32 %v2816, %v2672
        %v2897 = vsub.f32 %v2818, %v2675
        %v2898 = vsub.f32 %v2820, %v2678
        %v2899 = vsub.f32 %v2822, %v2681
        %v2900 = vsub.f32 %v2824, %v2684
        %v2901 = vsub.f32 %v2826, %v2687
        %v2902 = vsub.f32 %v2828, %v2690
        %v2903 = vsub.f32 %v2830, %v2693
        %v2904 = vsub.f32 %v2832, %v2696
        %v2905 = vsub.f32 %v2834, %v2699
        %v2906 = vsub.f32 %v2836, %v2702
        %v2907 = vsub.f32 %v2838, %v2705
        %v2908 = vsub.f32 %v2840, %v2708
        %v2909 = vsub.f32 %v2842, %v2711
        %v2910 = vsub.f32 %v2844, %v2714
        %v2911 = vsub.f32 %v2846, %v2717
        %v2912 = vsub.f32 %v2848, %v2720
        %vm2913 = vcmask 7168
        %2914 = vst.msk [vmem:[%s216] sm:$0xff] %vm2913, %v2849
        %2915 = vst.msk [vmem:[%s216 + $0x8] sm:$0xff] %vm2913, %v2850
        %2916 = vst.msk [vmem:[%s216 + $0x10] sm:$0xff] %vm2913, %v2851
        %2917 = vst.msk [vmem:[%s216 + $0x18] sm:$0xff] %vm2913, %v2852
        %2918 = vst.msk [vmem:[%s216 + $0x20] sm:$0xff] %vm2913, %v2853
        %2919 = vst.msk [vmem:[%s216 + $0x28] sm:$0xff] %vm2913, %v2854
        %2920 = vst.msk [vmem:[%s216 + $0x30] sm:$0xff] %vm2913, %v2855
        %2921 = vst.msk [vmem:[%s216 + $0x38] sm:$0xff] %vm2913, %v2856
        %2922 = vst.msk [vmem:[%s216 + $0x40] sm:$0xff] %vm2913, %v2857
        %2923 = vst.msk [vmem:[%s216 + $0x48] sm:$0xff] %vm2913, %v2858
        %2924 = vst.msk [vmem:[%s216 + $0x50] sm:$0xff] %vm2913, %v2859
        %2925 = vst.msk [vmem:[%s216 + $0x58] sm:$0xff] %vm2913, %v2860
        %2926 = vst.msk [vmem:[%s216 + $0x60] sm:$0xff] %vm2913, %v2861
        %2927 = vst.msk [vmem:[%s216 + $0x68] sm:$0xff] %vm2913, %v2862
        %2928 = vst.msk [vmem:[%s216 + $0x70] sm:$0xff] %vm2913, %v2863
        %2929 = vst.msk [vmem:[%s216 + $0x78] sm:$0xff] %vm2913, %v2864
        %2930 = vst.msk [vmem:[%s216 + $0x80] sm:$0xff] %vm2913, %v2865
        %2931 = vst.msk [vmem:[%s216 + $0x88] sm:$0xff] %vm2913, %v2866
        %2932 = vst.msk [vmem:[%s216 + $0x90] sm:$0xff] %vm2913, %v2867
        %2933 = vst.msk [vmem:[%s216 + $0x98] sm:$0xff] %vm2913, %v2868
        %2934 = vst.msk [vmem:[%s216 + $0xa0] sm:$0xff] %vm2913, %v2869
        %2935 = vst.msk [vmem:[%s216 + $0xa8] sm:$0xff] %vm2913, %v2870
        %2936 = vst.msk [vmem:[%s216 + $0xb0] sm:$0xff] %vm2913, %v2871
        %2937 = vst.msk [vmem:[%s216 + $0xb8] sm:$0xff] %vm2913, %v2872
        %2938 = vst.msk [vmem:[%s216 + $0xc0] sm:$0xff] %vm2913, %v2873
        %2939 = vst.msk [vmem:[%s216 + $0xc8] sm:$0xff] %vm2913, %v2874
        %2940 = vst.msk [vmem:[%s216 + $0xd0] sm:$0xff] %vm2913, %v2875
        %2941 = vst.msk [vmem:[%s216 + $0xd8] sm:$0xff] %vm2913, %v2876
        %2942 = vst.msk [vmem:[%s216 + $0xe0] sm:$0xff] %vm2913, %v2877
        %2943 = vst.msk [vmem:[%s216 + $0xe8] sm:$0xff] %vm2913, %v2878
        %2944 = vst.msk [vmem:[%s216 + $0xf0] sm:$0xff] %vm2913, %v2879
        %2945 = vst.msk [vmem:[%s216 + $0xf8] sm:$0xff] %vm2913, %v2880
        %2946 = vst.msk [vmem:[%s216 + $0x100] sm:$0xff] %vm2913, %v2881
        %2947 = vst.msk [vmem:[%s216 + $0x108] sm:$0xff] %vm2913, %v2882
        %2948 = vst.msk [vmem:[%s216 + $0x110] sm:$0xff] %vm2913, %v2883
        %2949 = vst.msk [vmem:[%s216 + $0x118] sm:$0xff] %vm2913, %v2884
        %2950 = vst.msk [vmem:[%s216 + $0x120] sm:$0xff] %vm2913, %v2885
        %2951 = vst.msk [vmem:[%s216 + $0x128] sm:$0xff] %vm2913, %v2886
        %2952 = vst.msk [vmem:[%s216 + $0x130] sm:$0xff] %vm2913, %v2887
        %2953 = vst.msk [vmem:[%s216 + $0x138] sm:$0xff] %vm2913, %v2888
        %2954 = vst.msk [vmem:[%s216 + $0x140] sm:$0xff] %vm2913, %v2889
        %2955 = vst.msk [vmem:[%s216 + $0x148] sm:$0xff] %vm2913, %v2890
        %2956 = vst.msk [vmem:[%s216 + $0x150] sm:$0xff] %vm2913, %v2891
        %2957 = vst.msk [vmem:[%s216 + $0x158] sm:$0xff] %vm2913, %v2892
        %2958 = vst.msk [vmem:[%s216 + $0x160] sm:$0xff] %vm2913, %v2893
        %2959 = vst.msk [vmem:[%s216 + $0x168] sm:$0xff] %vm2913, %v2894
        %2960 = vst.msk [vmem:[%s216 + $0x170] sm:$0xff] %vm2913, %v2895
        %2961 = vst.msk [vmem:[%s216 + $0x178] sm:$0xff] %vm2913, %v2896
        %2962 = vst.msk [vmem:[%s216 + $0x180] sm:$0xff] %vm2913, %v2897
        %2963 = vst.msk [vmem:[%s216 + $0x188] sm:$0xff] %vm2913, %v2898
        %2964 = vst.msk [vmem:[%s216 + $0x190] sm:$0xff] %vm2913, %v2899
        %2965 = vst.msk [vmem:[%s216 + $0x198] sm:$0xff] %vm2913, %v2900
        %2966 = vst.msk [vmem:[%s216 + $0x1a0] sm:$0xff] %vm2913, %v2901
        %2967 = vst.msk [vmem:[%s216 + $0x1a8] sm:$0xff] %vm2913, %v2902
        %2968 = vst.msk [vmem:[%s216 + $0x1b0] sm:$0xff] %vm2913, %v2903
        %2969 = vst.msk [vmem:[%s216 + $0x1b8] sm:$0xff] %vm2913, %v2904
        %2970 = vst.msk [vmem:[%s216 + $0x1c0] sm:$0xff] %vm2913, %v2905
        %2971 = vst.msk [vmem:[%s216 + $0x1c8] sm:$0xff] %vm2913, %v2906
        %2972 = vst.msk [vmem:[%s216 + $0x1d0] sm:$0xff] %vm2913, %v2907
        %2973 = vst.msk [vmem:[%s216 + $0x1d8] sm:$0xff] %vm2913, %v2908
        %2974 = vst.msk [vmem:[%s216 + $0x1e0] sm:$0xff] %vm2913, %v2909
        %2975 = vst.msk [vmem:[%s216 + $0x1e8] sm:$0xff] %vm2913, %v2910
        %2976 = vst.msk [vmem:[%s216 + $0x1f0] sm:$0xff] %vm2913, %v2911
        %2977 = vst.msk [vmem:[%s216 + $0x1f8] sm:$0xff] %vm2913, %v2912
        %s2978 = smul.u32 64, %s17
        %p2979 = scmp.lt.s32.totalorder %s2978, 127
        %s2980 = scalar_select %p2979, %s2978, 127
        %s2981 = smul.addr %s2980, 8
        %s2982 = scalar_lea.vmem %s3, %s2981
        // Predicated region
        $region37: #{tpu_custom_call.1} parent=31 // pred_check
          %p2983 = pneg %p108
        $region38: #{tpu_custom_call.1} parent=31 // pred_check_branch
          %2985 = sbr.rel (%p2983) target = $region40
        $region39: #{tpu_custom_call.1} parent=31 // pred_region
          %s2986 = smul.u32 64, %s17
        $region40: #{tpu_custom_call.1} parent=31 // pred_fallthru
          _
      $region32: #{tpu_custom_call.1} parent=5 // pred_fallthru
        _
      %p2987 = scmp.le.s32.totalorder 2, %s12
      // Predicated region
      $region41: #{tpu_custom_call.1} parent=5 // pred_check
        %p2988 = pneg %p2987
      $region42: #{tpu_custom_call.1} parent=5 // pred_check_branch
        %2990 = sbr.rel (%p2988) target = $region44
      $region43: #{tpu_custom_call.1} parent=5 // pred_region
        %s2991 = ssub.s32 %s12, 2
        // Predicated region
        $region45: #{tpu_custom_call.1} parent=43 // pred_check
          %p2992 = pneg %p114
        $region46: #{tpu_custom_call.1} parent=43 // pred_check_branch
          %2994 = sbr.rel (%p2992) target = $region48
        $region47: #{tpu_custom_call.1} parent=43 // pred_region
          %s2995 = smul.u32 64, %s18
          %p2996 = scmp.lt.s32.totalorder %s2995, 127
          %s2997 = scalar_select %p2996, %s2995, 127
          %s2998 = smul.addr %s2997, 8
          %s2999 = scalar_lea.vmem %s3, %s2998
        $region48: #{tpu_custom_call.1} parent=43 // pred_fallthru
          _
      $region44: #{tpu_custom_call.1} parent=5 // pred_fallthru
        _
    $region6: #{tpu_custom_call.1} parent=1 // loop_footer
      %s16 = sadd.s32 1, %s12
    $region7: #{tpu_custom_call.1} parent=1 // loop_footer_branch
      %11 = sbr.rel target = $region3
    $region8: #{tpu_custom_call.1} parent=1 // loop_exit
      _
    %3000 = vsyncpa [#allocation3], 1
    %s3001 = scalar_lea.sflag [#allocation3], 1
    %3002 = vsyncpa %s3001, 1

</llo_original>
